<compile_context>
chip_gen: v5e
topology: v5e:2x2
jax: 0.10.0
libtpu: 0.0.40
codegen_flags: <defaults>
</compile_context>

<pallas_src>
import math

import jax
import jax.numpy as jnp
from jax.experimental import pallas as pl
from jax.experimental.pallas import tpu as pltpu

# ---------------- model hyper-parameters (small, consistent with module) ----
B = 2            # batch
S = 8            # sequence length
D = 32           # model size ("size")
NUM_HEADS = 8
HEAD_DIM = D // NUM_HEADS
H_FF = 64        # hidden_size of PositionwiseFeedForward (small stand-in)
EPS = 1e-6
NEG_INF = -1e18  # OpenNMT masked_fill value


# ----------------------------- Pallas kernel --------------------------------
def _encoder_layer_kernel(x_ref, mask_ref, vec_ref, w3_ref, b3_ref, wo3_ref,
                          w1_ref, w2_ref, out_ref):
    # x_ref   : (N, D)   tokens of this block (N = batches_per_block * S)
    # mask_ref: (N, N)   1.0 where key j is disallowed for query i
    # vec_ref : (8, 128) packed small vectors (LN params + biases)
    # w3_ref  : (3H, D, hd)  head-major fused Q/K/V weights
    # b3_ref  : (3H, 1, hd)  head-major fused Q/K/V biases
    # wo3_ref : (H, hd, D)   per-head output-projection weights
    N = x_ref.shape[0]
    x = x_ref[...]                        # (N, D)
    vec = vec_ref[...]                    # (8, 128)

    ln1_g = vec[0:1, :D]
    ln1_b = vec[1:2, :D]
    ln2_g = vec[2:3, :D]
    ln2_b = vec[3:4, :D]
    bo = vec[4:5, :D]
    b2 = vec[5:6, :D]
    b1 = vec[6:7, :H_FF]

    def layer_norm(v, g, b):
        mu = jnp.mean(v, axis=-1, keepdims=True)
        var = jnp.mean((v - mu) ** 2, axis=-1, keepdims=True)
        return (v - mu) * jax.lax.rsqrt(var + EPS) * g + b

    # ---- pre-norm + fused head-major QKV projection (one batched MXU seq) ----
    xn = layer_norm(x, ln1_g, ln1_b)                         # (N, D)
    xb = jnp.broadcast_to(xn, (3 * NUM_HEADS, N, D))         # (3H, N, D)
    qkv = jax.lax.dot_general(
        xb, w3_ref[...],
        dimension_numbers=(((2,), (1,)), ((0,), (0,))),
        preferred_element_type=jnp.float32) + b3_ref[...]    # (3H, N, hd)

    scale = 1.0 / math.sqrt(HEAD_DIM)
    q = qkv[0:NUM_HEADS] * scale                             # (H, N, hd)
    k = qkv[NUM_HEADS:2 * NUM_HEADS]                         # (H, N, hd)
    v = qkv[2 * NUM_HEADS:3 * NUM_HEADS]                     # (H, N, hd)

    # ---- scaled dot-product attention, batched over the head axis ----
    scores = jax.lax.dot_general(
        q, k, dimension_numbers=(((2,), (2,)), ((0,), (0,))),
        preferred_element_type=jnp.float32)                  # (H, N, N)
    # masked_fill semantics (replace, like OpenNMT), broadcast over heads.
    scores = jnp.where(mask_ref[...] > 0.5, NEG_INF, scores)

    m = jnp.max(scores, axis=-1, keepdims=True)
    e = jnp.exp(scores - m)
    probs = e * pl.reciprocal(jnp.sum(e, axis=-1, keepdims=True), approx=True)

    ctx = jax.lax.dot_general(
        probs, v, dimension_numbers=(((2,), (1,)), ((0,), (0,))),
        preferred_element_type=jnp.float32)                  # (H, N, hd)

    # ---- output projection: sum_h ctx_h @ Wo_h  ==  concat_h(ctx_h) @ Wo ----
    proj = jax.lax.dot_general(
        ctx, wo3_ref[...], dimension_numbers=(((2,), (1,)), ((0,), (0,))),
        preferred_element_type=jnp.float32)                  # (H, N, D)
    attn_out = jnp.sum(proj, axis=0) + bo                    # (N, D)

    # dropout(context) + input  -> dropout is identity in eval mode
    # TODO(synk): train-mode dropout would need pltpu.prng_seed/prng_random_bits.
    out = attn_out + x

    # ---- position-wise feed-forward (pre-norm, residual) ----
    on = layer_norm(out, ln2_g, ln2_b)
    h1 = jnp.maximum(
        jnp.dot(on, w1_ref[...], preferred_element_type=jnp.float32) + b1, 0.0)
    ff = jnp.dot(h1, w2_ref[...], preferred_element_type=jnp.float32) + b2

    out_ref[...] = ff + out


# ------------------------------ wrapper --------------------------------------
def _batches_per_block(batch_size):
    """Fold the whole batch into one grid step on single-TC chips (v5e/v6e);
    keep one batch per parallel grid step on multi-TC chips (v7x etc.)."""
    try:
        kind = jax.devices()[0].device_kind.lower()
    except Exception:
        return batch_size
    single_tc = any(t in kind for t in
                    ("v5e", "v5 lite", "v5lite", "v6e", "v6 lite", "v6lite"))
    return batch_size if single_tc else 1


def transformer_encoder_layer(x, mask, params):
    """x: (B, S, D) f32, mask: (B, 1, S) bool (True = padded key position)."""
    B_, S_, D_ = x.shape
    assert (B_, S_, D_) == (B, S, D)

    bpb = _batches_per_block(B_)          # batches folded into one grid step
    nblk = B_ // bpb
    N = bpb * S_                          # tokens per grid step

    p = params
    # head-major fused Q/K/V weights: (3H, D, hd); g = role*H + h
    w3 = (jnp.concatenate([p["wq"], p["wk"], p["wv"]], axis=1)
          .reshape(D, 3, NUM_HEADS, HEAD_DIM)
          .transpose(1, 2, 0, 3)
          .reshape(3 * NUM_HEADS, D, HEAD_DIM))
    b3 = (jnp.concatenate([p["bq"], p["bk"], p["bv"]])
          .reshape(3 * NUM_HEADS, 1, HEAD_DIM))
    # per-head output projection: wo3[h, d, :] = Wo[h*hd + d, :]
    wo3 = p["wo"].reshape(NUM_HEADS, HEAD_DIM, D)

    # pack all small vectors into one (8, 128) VMEM block
    vecs = jnp.zeros((8, 128), jnp.float32)
    vecs = vecs.at[0, :D].set(p["ln1_g"])
    vecs = vecs.at[1, :D].set(p["ln1_b"])
    vecs = vecs.at[2, :D].set(p["ln2_g"])
    vecs = vecs.at[3, :D].set(p["ln2_b"])
    vecs = vecs.at[4, :D].set(p["bo"])
    vecs = vecs.at[5, :D].set(p["b2"])
    vecs = vecs.at[6, :H_FF].set(p["b1"])

    # combined "disallowed key" mask: key padding OR cross-batch (block-diag)
    pad = mask.reshape(B_, S_)                              # True = padded key
    pad_blk = pad.reshape(nblk, N)                          # (nblk, N)
    tok_batch = jnp.arange(N) // S_
    cross = tok_batch[:, None] != tok_batch[None, :]        # (N, N)
    disallow = jnp.logical_or(cross[None, :, :], pad_blk[:, None, :])
    maskf = disallow.astype(jnp.float32).reshape(nblk * N, N)

    x2 = x.reshape(B_ * S_, D)

    out2 = pl.pallas_call(
        _encoder_layer_kernel,
        out_shape=jax.ShapeDtypeStruct((B_ * S_, D), jnp.float32),
        grid=(nblk,),
        in_specs=[
            pl.BlockSpec((N, D), lambda b: (b, 0)),                          # x
            pl.BlockSpec((N, N), lambda b: (b, 0)),                          # mask
            pl.BlockSpec((8, 128), lambda b: (0, 0)),                        # packed vecs
            pl.BlockSpec((3 * NUM_HEADS, D, HEAD_DIM), lambda b: (0, 0, 0)),  # Wqkv
            pl.BlockSpec((3 * NUM_HEADS, 1, HEAD_DIM), lambda b: (0, 0, 0)),  # bqkv
            pl.BlockSpec((NUM_HEADS, HEAD_DIM, D), lambda b: (0, 0, 0)),      # Wo
            pl.BlockSpec((D, H_FF), lambda b: (0, 0)),                        # W1
            pl.BlockSpec((H_FF, D), lambda b: (0, 0)),                        # W2
        ],
        out_specs=pl.BlockSpec((N, D), lambda b: (b, 0)),
        compiler_params=pltpu.CompilerParams(
            dimension_semantics=("parallel",)),
    )(x2, maskf, vecs, w3, b3, wo3, p["w1"], p["w2"])

    return out2.reshape(B_, S_, D)


# ------------------------- pure-JAX reference (check) -----------------------
def reference(x, mask, p):
    def ln(v, g, b):
        mu = v.mean(-1, keepdims=True)
        var = ((v - mu) ** 2).mean(-1, keepdims=True)
        return (v - mu) / jnp.sqrt(var + EPS) * g + b

    xn = ln(x, p["ln1_g"], p["ln1_b"])
    q = xn @ p["wq"] + p["bq"]
    k = xn @ p["wk"] + p["bk"]
    v = xn @ p["wv"] + p["bv"]

    def split(t):  # (B,S,D) -> (B,H,S,hd)
        return t.reshape(B, S, NUM_HEADS, HEAD_DIM).transpose(0, 2, 1, 3)

    qh, kh, vh = split(q) / math.sqrt(HEAD_DIM), split(k), split(v)
    scores = jnp.einsum("bhqd,bhkd->bhqk", qh, kh)
    scores = jnp.where(mask[:, :, None, :], NEG_INF, scores)
    attn = jax.nn.softmax(scores, axis=-1)
    ctx = jnp.einsum("bhqk,bhkd->bhqd", attn, vh)
    ctx = ctx.transpose(0, 2, 1, 3).reshape(B, S, D)
    out = ctx @ p["wo"] + p["bo"] + x

    on = ln(out, p["ln2_g"], p["ln2_b"])
    ff = jnp.maximum(on @ p["w1"] + p["b1"], 0.0) @ p["w2"] + p["b2"]
    return ff + out


# --------------------------------- main --------------------------------------
if __name__ == "__main__":
    key = jax.random.PRNGKey(0)
    keys = jax.random.split(key, 18)

    def rnd(k, shape, scale=0.1):
        return (scale * jax.random.normal(k, shape)).astype(jnp.float32)

    params = {
        "ln1_g": (1.0 + rnd(keys[13], (D,))).astype(jnp.float32),
        "ln1_b": rnd(keys[14], (D,)),
        "wq": rnd(keys[0], (D, D)), "bq": rnd(keys[1], (D,)),
        "wk": rnd(keys[2], (D, D)), "bk": rnd(keys[3], (D,)),
        "wv": rnd(keys[4], (D, D)), "bv": rnd(keys[5], (D,)),
        "wo": rnd(keys[6], (D, D)), "bo": rnd(keys[7], (D,)),
        "ln2_g": (1.0 + rnd(keys[15], (D,))).astype(jnp.float32),
        "ln2_b": rnd(keys[16], (D,)),
        "w1": rnd(keys[8], (D, H_FF)), "b1": rnd(keys[9], (H_FF,)),
        "w2": rnd(keys[10], (H_FF, D)), "b2": rnd(keys[11], (D,)),
    }

    x = rnd(keys[12], (B, S, D), scale=1.0)
    lengths = jnp.array([S, 5])                        # batch 1 has 3 padded steps
    mask = (jnp.arange(S)[None, None, :] >= lengths[:, None, None])  # (B,1,S) bool

    out = transformer_encoder_layer(x, mask, params)
    out = jax.block_until_ready(out)

    ref = reference(x, mask, params)
    err = float(jnp.max(jnp.abs(out - ref)))
    assert jnp.allclose(out, ref, atol=1e-3, rtol=1e-3), \
        f"mismatch vs reference (max abs err {err})"

    print("KERNEL_OK")
</pallas_src>

<mosaic_0001>
module attributes {stable_mosaic.version = 11 : i64} {
  func.func @_encoder_layer_kernel(%arg0: i32, %arg1: memref<8x32xf32, #tpu.memory_space<vmem>>, %arg2: memref<8x8xf32, #tpu.memory_space<vmem>>, %arg3: memref<8x128xf32, #tpu.memory_space<vmem>>, %arg4: memref<24x32x4xf32, #tpu.memory_space<vmem>>, %arg5: memref<24x1x4xf32, #tpu.memory_space<vmem>>, %arg6: memref<8x4x32xf32, #tpu.memory_space<vmem>>, %arg7: memref<32x64xf32, #tpu.memory_space<vmem>>, %arg8: memref<64x32xf32, #tpu.memory_space<vmem>>, %arg9: memref<8x32xf32, #tpu.memory_space<vmem>>) attributes {dimension_semantics = [#tpu.dimension_semantics<parallel>], iteration_bounds = array<i64: 2>, scalar_prefetch = 0 : i64, scratch_operands = 0 : i64, tpu.core_type = #tpu.core_type<tc>, window_params = [{transform_indices = @transform_0, window_bounds = array<i64: 8, 32>}, {transform_indices = @transform_1, window_bounds = array<i64: 8, 8>}, {pipeline_mode = #tpu.pipeline_mode<synchronous>, transform_indices = @transform_2, window_bounds = array<i64: 8, 128>}, {pipeline_mode = #tpu.pipeline_mode<synchronous>, transform_indices = @transform_3, window_bounds = array<i64: 24, 32, 4>}, {pipeline_mode = #tpu.pipeline_mode<synchronous>, transform_indices = @transform_4, window_bounds = array<i64: 24, 1, 4>}, {pipeline_mode = #tpu.pipeline_mode<synchronous>, transform_indices = @transform_5, window_bounds = array<i64: 8, 4, 32>}, {pipeline_mode = #tpu.pipeline_mode<synchronous>, transform_indices = @transform_6, window_bounds = array<i64: 32, 64>}, {pipeline_mode = #tpu.pipeline_mode<synchronous>, transform_indices = @transform_7, window_bounds = array<i64: 64, 32>}, {transform_indices = @transform_8, window_bounds = array<i64: 8, 32>}]} {
    %c0 = arith.constant 0 : index
    %c0_0 = arith.constant 0 : index
    %0 = vector.load %arg1[%c0, %c0_0] : memref<8x32xf32, #tpu.memory_space<vmem>>, vector<8x32xf32>
    %c0_1 = arith.constant 0 : index
    %c0_2 = arith.constant 0 : index
    %1 = vector.load %arg3[%c0_1, %c0_2] : memref<8x128xf32, #tpu.memory_space<vmem>>, vector<8x128xf32>
    %2 = vector.extract_strided_slice %1 {offsets = [0, 0], sizes = [1, 32], strides = [1, 1]} : vector<8x128xf32> to vector<1x32xf32>
    %3 = vector.extract_strided_slice %1 {offsets = [1, 0], sizes = [1, 32], strides = [1, 1]} : vector<8x128xf32> to vector<1x32xf32>
    %4 = vector.extract_strided_slice %1 {offsets = [2, 0], sizes = [1, 32], strides = [1, 1]} : vector<8x128xf32> to vector<1x32xf32>
    %5 = vector.extract_strided_slice %1 {offsets = [3, 0], sizes = [1, 32], strides = [1, 1]} : vector<8x128xf32> to vector<1x32xf32>
    %6 = vector.extract_strided_slice %1 {offsets = [4, 0], sizes = [1, 32], strides = [1, 1]} : vector<8x128xf32> to vector<1x32xf32>
    %7 = vector.extract_strided_slice %1 {offsets = [5, 0], sizes = [1, 32], strides = [1, 1]} : vector<8x128xf32> to vector<1x32xf32>
    %8 = vector.extract_strided_slice %1 {offsets = [6, 0], sizes = [1, 64], strides = [1, 1]} : vector<8x128xf32> to vector<1x64xf32>
    %cst = arith.constant dense<0.000000e+00> : vector<8xf32>
    %9 = vector.multi_reduction <add>, %0, %cst [1] : vector<8x32xf32> to vector<8xf32>
    %10 = vector.shape_cast %9 : vector<8xf32> to vector<8x1xf32>
    %cst_3 = arith.constant 3.200000e+01 : f32
    %11 = vector.broadcast %cst_3 : f32 to vector<8x1xf32>
    %12 = arith.divf %10, %11 : vector<8x1xf32>
    %13 = vector.broadcast %12 : vector<8x1xf32> to vector<8x32xf32>
    %14 = arith.subf %0, %13 : vector<8x32xf32>
    %15 = arith.mulf %14, %14 : vector<8x32xf32>
    %cst_4 = arith.constant dense<0.000000e+00> : vector<8xf32>
    %16 = vector.multi_reduction <add>, %15, %cst_4 [1] : vector<8x32xf32> to vector<8xf32>
    %17 = vector.shape_cast %16 : vector<8xf32> to vector<8x1xf32>
    %cst_5 = arith.constant 3.200000e+01 : f32
    %18 = vector.broadcast %cst_5 : f32 to vector<8x1xf32>
    %19 = arith.divf %17, %18 : vector<8x1xf32>
    %20 = vector.broadcast %12 : vector<8x1xf32> to vector<8x32xf32>
    %21 = arith.subf %0, %20 : vector<8x32xf32>
    %cst_6 = arith.constant 9.99999997E-7 : f32
    %22 = vector.broadcast %cst_6 : f32 to vector<8x1xf32>
    %23 = arith.addf %19, %22 : vector<8x1xf32>
    %24 = math.rsqrt %23 : vector<8x1xf32>
    %25 = vector.broadcast %24 : vector<8x1xf32> to vector<8x32xf32>
    %26 = arith.mulf %21, %25 : vector<8x32xf32>
    %27 = vector.broadcast %2 : vector<1x32xf32> to vector<8x32xf32>
    %28 = arith.mulf %26, %27 : vector<8x32xf32>
    %29 = vector.broadcast %3 : vector<1x32xf32> to vector<8x32xf32>
    %30 = arith.addf %28, %29 : vector<8x32xf32>
    %31 = vector.shape_cast %30 : vector<8x32xf32> to vector<1x8x32xf32>
    %32 = vector.broadcast %31 : vector<1x8x32xf32> to vector<24x8x32xf32>
    %c0_7 = arith.constant 0 : index
    %c0_8 = arith.constant 0 : index
    %c0_9 = arith.constant 0 : index
    %33 = vector.load %arg4[%c0_7, %c0_8, %c0_9] : memref<24x32x4xf32, #tpu.memory_space<vmem>>, vector<24x32x4xf32>
    %cst_10 = arith.constant dense<0.000000e+00> : vector<24x8x4xf32>
    %34 = tpu.matmul %32, %33, %cst_10 {dimension_numbers = #tpu.dot_dimension_numbers<[2], [1], [1], [2], [0, 0, 0, 1, 1, 2], [0], [0]>} : vector<24x8x32xf32>, vector<24x32x4xf32>, vector<24x8x4xf32> -> vector<24x8x4xf32>
    %c0_11 = arith.constant 0 : index
    %c0_12 = arith.constant 0 : index
    %c0_13 = arith.constant 0 : index
    %35 = vector.load %arg5[%c0_11, %c0_12, %c0_13] : memref<24x1x4xf32, #tpu.memory_space<vmem>>, vector<24x1x4xf32>
    %36 = vector.broadcast %35 : vector<24x1x4xf32> to vector<24x8x4xf32>
    %37 = arith.addf %34, %36 : vector<24x8x4xf32>
    %38 = vector.extract_strided_slice %37 {offsets = [0, 0, 0], sizes = [8, 8, 4], strides = [1, 1, 1]} : vector<24x8x4xf32> to vector<8x8x4xf32>
    %cst_14 = arith.constant 5.000000e-01 : f32
    %39 = vector.broadcast %cst_14 : f32 to vector<8x8x4xf32>
    %40 = arith.mulf %38, %39 : vector<8x8x4xf32>
    %41 = vector.extract_strided_slice %37 {offsets = [8, 0, 0], sizes = [8, 8, 4], strides = [1, 1, 1]} : vector<24x8x4xf32> to vector<8x8x4xf32>
    %42 = vector.extract_strided_slice %37 {offsets = [16, 0, 0], sizes = [8, 8, 4], strides = [1, 1, 1]} : vector<24x8x4xf32> to vector<8x8x4xf32>
    %cst_15 = arith.constant dense<0.000000e+00> : vector<8x8x8xf32>
    %43 = tpu.matmul %40, %41, %cst_15 {dimension_numbers = #tpu.dot_dimension_numbers<[2], [2], [1], [1], [0, 0, 0, 1, 1, 1], [0], [0]>} : vector<8x8x4xf32>, vector<8x8x4xf32>, vector<8x8x8xf32> -> vector<8x8x8xf32>
    %c0_16 = arith.constant 0 : index
    %c0_17 = arith.constant 0 : index
    %44 = vector.load %arg2[%c0_16, %c0_17] : memref<8x8xf32, #tpu.memory_space<vmem>>, vector<8x8xf32>
    %cst_18 = arith.constant 5.000000e-01 : f32
    %45 = vector.broadcast %cst_18 : f32 to vector<8x8xf32>
    %46 = arith.cmpf ogt, %44, %45 : vector<8x8xf32>
    %cst_19 = arith.constant -9.99999984E+17 : f32
    %47 = vector.shape_cast %46 : vector<8x8xi1> to vector<1x8x8xi1>
    %48 = vector.broadcast %47 : vector<1x8x8xi1> to vector<8x8x8xi1>
    %49 = vector.broadcast %cst_19 : f32 to vector<8x8x8xf32>
    %50 = arith.select %48, %49, %43 : vector<8x8x8xi1>, vector<8x8x8xf32>
    %cst_20 = arith.constant dense<0xFF800000> : vector<8x8xf32>
    %51 = vector.multi_reduction <maximumf>, %50, %cst_20 [2] : vector<8x8x8xf32> to vector<8x8xf32>
    %52 = vector.shape_cast %51 : vector<8x8xf32> to vector<8x8x1xf32>
    %53 = vector.broadcast %52 : vector<8x8x1xf32> to vector<8x8x8xf32>
    %54 = arith.subf %50, %53 : vector<8x8x8xf32>
    %55 = math.exp %54 : vector<8x8x8xf32>
    %cst_21 = arith.constant dense<0.000000e+00> : vector<8x8xf32>
    %56 = vector.multi_reduction <add>, %55, %cst_21 [2] : vector<8x8x8xf32> to vector<8x8xf32>
    %57 = vector.shape_cast %56 : vector<8x8xf32> to vector<8x8x1xf32>
    %58 = tpu.reciprocal %57 {approx = true} : vector<8x8x1xf32> -> vector<8x8x1xf32>
    %59 = vector.broadcast %58 : vector<8x8x1xf32> to vector<8x8x8xf32>
    %60 = arith.mulf %55, %59 : vector<8x8x8xf32>
    %cst_22 = arith.constant dense<0.000000e+00> : vector<8x8x4xf32>
    %61 = tpu.matmul %60, %42, %cst_22 {dimension_numbers = #tpu.dot_dimension_numbers<[2], [1], [1], [2], [0, 0, 0, 1, 1, 2], [0], [0]>} : vector<8x8x8xf32>, vector<8x8x4xf32>, vector<8x8x4xf32> -> vector<8x8x4xf32>
    %c0_23 = arith.constant 0 : index
    %c0_24 = arith.constant 0 : index
    %c0_25 = arith.constant 0 : index
    %62 = vector.load %arg6[%c0_23, %c0_24, %c0_25] : memref<8x4x32xf32, #tpu.memory_space<vmem>>, vector<8x4x32xf32>
    %cst_26 = arith.constant dense<0.000000e+00> : vector<8x8x32xf32>
    %63 = tpu.matmul %61, %62, %cst_26 {dimension_numbers = #tpu.dot_dimension_numbers<[2], [1], [1], [2], [0, 0, 0, 1, 1, 2], [0], [0]>} : vector<8x8x4xf32>, vector<8x4x32xf32>, vector<8x8x32xf32> -> vector<8x8x32xf32>
    %cst_27 = arith.constant dense<0.000000e+00> : vector<8x32xf32>
    %64 = vector.multi_reduction <add>, %63, %cst_27 [0] : vector<8x8x32xf32> to vector<8x32xf32>
    %65 = vector.broadcast %6 : vector<1x32xf32> to vector<8x32xf32>
    %66 = arith.addf %64, %65 : vector<8x32xf32>
    %67 = arith.addf %66, %0 : vector<8x32xf32>
    %cst_28 = arith.constant dense<0.000000e+00> : vector<8xf32>
    %68 = vector.multi_reduction <add>, %67, %cst_28 [1] : vector<8x32xf32> to vector<8xf32>
    %69 = vector.shape_cast %68 : vector<8xf32> to vector<8x1xf32>
    %cst_29 = arith.constant 3.200000e+01 : f32
    %70 = vector.broadcast %cst_29 : f32 to vector<8x1xf32>
    %71 = arith.divf %69, %70 : vector<8x1xf32>
    %72 = vector.broadcast %71 : vector<8x1xf32> to vector<8x32xf32>
    %73 = arith.subf %67, %72 : vector<8x32xf32>
    %74 = arith.mulf %73, %73 : vector<8x32xf32>
    %cst_30 = arith.constant dense<0.000000e+00> : vector<8xf32>
    %75 = vector.multi_reduction <add>, %74, %cst_30 [1] : vector<8x32xf32> to vector<8xf32>
    %76 = vector.shape_cast %75 : vector<8xf32> to vector<8x1xf32>
    %cst_31 = arith.constant 3.200000e+01 : f32
    %77 = vector.broadcast %cst_31 : f32 to vector<8x1xf32>
    %78 = arith.divf %76, %77 : vector<8x1xf32>
    %79 = vector.broadcast %71 : vector<8x1xf32> to vector<8x32xf32>
    %80 = arith.subf %67, %79 : vector<8x32xf32>
    %cst_32 = arith.constant 9.99999997E-7 : f32
    %81 = vector.broadcast %cst_32 : f32 to vector<8x1xf32>
    %82 = arith.addf %78, %81 : vector<8x1xf32>
    %83 = math.rsqrt %82 : vector<8x1xf32>
    %84 = vector.broadcast %83 : vector<8x1xf32> to vector<8x32xf32>
    %85 = arith.mulf %80, %84 : vector<8x32xf32>
    %86 = vector.broadcast %4 : vector<1x32xf32> to vector<8x32xf32>
    %87 = arith.mulf %85, %86 : vector<8x32xf32>
    %88 = vector.broadcast %5 : vector<1x32xf32> to vector<8x32xf32>
    %89 = arith.addf %87, %88 : vector<8x32xf32>
    %c0_33 = arith.constant 0 : index
    %c0_34 = arith.constant 0 : index
    %90 = vector.load %arg7[%c0_33, %c0_34] : memref<32x64xf32, #tpu.memory_space<vmem>>, vector<32x64xf32>
    %cst_35 = arith.constant dense<0.000000e+00> : vector<8x64xf32>
    %91 = tpu.matmul %89, %90, %cst_35 {dimension_numbers = #tpu.dot_dimension_numbers<[1], [0], [0], [1], [0, 0, 1, 1], [], []>} : vector<8x32xf32>, vector<32x64xf32>, vector<8x64xf32> -> vector<8x64xf32>
    %92 = vector.broadcast %8 : vector<1x64xf32> to vector<8x64xf32>
    %93 = arith.addf %91, %92 : vector<8x64xf32>
    %cst_36 = arith.constant 0.000000e+00 : f32
    %94 = vector.broadcast %cst_36 : f32 to vector<8x64xf32>
    %95 = arith.maximumf %93, %94 : vector<8x64xf32>
    %c0_37 = arith.constant 0 : index
    %c0_38 = arith.constant 0 : index
    %96 = vector.load %arg8[%c0_37, %c0_38] : memref<64x32xf32, #tpu.memory_space<vmem>>, vector<64x32xf32>
    %cst_39 = arith.constant dense<0.000000e+00> : vector<8x32xf32>
    %97 = tpu.matmul %95, %96, %cst_39 {dimension_numbers = #tpu.dot_dimension_numbers<[1], [0], [0], [1], [0, 0, 1, 1], [], []>} : vector<8x64xf32>, vector<64x32xf32>, vector<8x32xf32> -> vector<8x32xf32>
    %98 = vector.broadcast %7 : vector<1x32xf32> to vector<8x32xf32>
    %99 = arith.addf %97, %98 : vector<8x32xf32>
    %100 = arith.addf %99, %67 : vector<8x32xf32>
    %c0_40 = arith.constant 0 : index
    %c0_41 = arith.constant 0 : index
    %101 = vector.load %arg9[%c0_40, %c0_41] : memref<8x32xf32, #tpu.memory_space<vmem>>, vector<8x32xf32>
    tpu.vector_store %arg9[%c0_40, %c0_41], %100 {strides = array<i32>} : memref<8x32xf32, #tpu.memory_space<vmem>>, vector<8x32xf32>,
    return
  }
  func.func @transform_0(%arg0: i32) -> (i32, i32) {
    %c0_i32 = arith.constant 0 : i32
    %c0_i32_0 = arith.constant 0 : i32
    return %arg0, %c0_i32 : i32, i32
  }
  func.func @transform_1(%arg0: i32) -> (i32, i32) {
    %c0_i32 = arith.constant 0 : i32
    %c0_i32_0 = arith.constant 0 : i32
    return %arg0, %c0_i32 : i32, i32
  }
  func.func @transform_2(%arg0: i32) -> (i32, i32) {
    %c0_i32 = arith.constant 0 : i32
    %c0_i32_0 = arith.constant 0 : i32
    %c0_i32_1 = arith.constant 0 : i32
    return %c0_i32, %c0_i32_0 : i32, i32
  }
  func.func @transform_3(%arg0: i32) -> (i32, i32, i32) {
    %c0_i32 = arith.constant 0 : i32
    %c0_i32_0 = arith.constant 0 : i32
    %c0_i32_1 = arith.constant 0 : i32
    %c0_i32_2 = arith.constant 0 : i32
    return %c0_i32, %c0_i32_0, %c0_i32_1 : i32, i32, i32
  }
  func.func @transform_4(%arg0: i32) -> (i32, i32, i32) {
    %c0_i32 = arith.constant 0 : i32
    %c0_i32_0 = arith.constant 0 : i32
    %c0_i32_1 = arith.constant 0 : i32
    %c0_i32_2 = arith.constant 0 : i32
    return %c0_i32, %c0_i32_0, %c0_i32_1 : i32, i32, i32
  }
  func.func @transform_5(%arg0: i32) -> (i32, i32, i32) {
    %c0_i32 = arith.constant 0 : i32
    %c0_i32_0 = arith.constant 0 : i32
    %c0_i32_1 = arith.constant 0 : i32
    %c0_i32_2 = arith.constant 0 : i32
    return %c0_i32, %c0_i32_0, %c0_i32_1 : i32, i32, i32
  }
  func.func @transform_6(%arg0: i32) -> (i32, i32) {
    %c0_i32 = arith.constant 0 : i32
    %c0_i32_0 = arith.constant 0 : i32
    %c0_i32_1 = arith.constant 0 : i32
    return %c0_i32, %c0_i32_0 : i32, i32
  }
  func.func @transform_7(%arg0: i32) -> (i32, i32) {
    %c0_i32 = arith.constant 0 : i32
    %c0_i32_0 = arith.constant 0 : i32
    %c0_i32_1 = arith.constant 0 : i32
    return %c0_i32, %c0_i32_0 : i32, i32
  }
  func.func @transform_8(%arg0: i32) -> (i32, i32) {
    %c0_i32 = arith.constant 0 : i32
    %c0_i32_0 = arith.constant 0 : i32
    return %arg0, %c0_i32 : i32, i32
  }
}

</mosaic_0001>

<llo_original>
// kernel: tpu_custom_call.1
$region0: #{tpu_custom_call.1}
  #allocation0 [shape = 'u32[]', space=smem, size = 0x4, offset = 0x4, fixed_abs, tag = 'smem constant byte address 0x4 - core index']
  #allocation1 [shape = 'u32[72,128]{1,0:T(1,128)}', space=vmem, size = 0x9000, scoped, tag = 'internal scratch']
  %s0 = inlined_call_operand.vmem [shape: f32[16,32], index: 0, kind: input, shape index: {}]
  %s1 = inlined_call_operand.vmem [shape: f32[16,8], index: 1, kind: input, shape index: {}]
  %s2 = inlined_call_operand.vmem [shape: f32[8,128], index: 2, kind: input, shape index: {}]
  %s3 = inlined_call_operand.vmem [shape: f32[24,32,4], index: 3, kind: input, shape index: {}]
  %s4 = inlined_call_operand.vmem [shape: f32[24,1,4], index: 4, kind: input, shape index: {}]
  %s5 = inlined_call_operand.vmem [shape: f32[8,4,32], index: 5, kind: input, shape index: {}]
  %s6 = inlined_call_operand.vmem [shape: f32[32,64], index: 6, kind: input, shape index: {}]
  %s7 = inlined_call_operand.vmem [shape: f32[64,32], index: 7, kind: input, shape index: {}]
  %s8 = inlined_call_operand.hbm [shape: f32[16,32], index: 8, kind: output, shape index: {}]
  %s9 = sld [smem:[#allocation0]]
  $region65: #{tpu_custom_call.1} parent=0
    _
  %s11 = ssub.s32 1, %s9
  %s12 = scalar_select 0, %s11, %s9
  $region1: #{tpu_custom_call.1} parent=0
    #allocation2 [shape = 'u8[8192]{0}', space=vmem, size = 0x2000, scoped, tag = 'output window, operand 0']
    #allocation3 [shape = 's32[2]{0}', space=sflag, size = 0x8, scoped, tag = 'scoped memory for tpu_custom_call.1']
    %13 = vsyncpa [#allocation3], 0
    %s14 = scalar_lea.sflag [#allocation3], 1
    %15 = vsyncpa %s14, 0
    loop: start=0, step=1, limit=4
    $region2: #{tpu_custom_call.1} parent=1 // loop_pre_header
      _
    $region3: #{tpu_custom_call.1} parent=1 // loop_header
      %s17 = sphi 0, %s21
      %p18 = scmp.ge.s32.totalorder %s17, 4
      %s27 = sphi 0, %s29
      %s30 = sphi 0, %s27
      %s31 = sphi 0, %s30
      %s47 = sphi 0, %s31
      %s53 = sphi 0, %s55
      %s56 = sphi 0, %s53
      %s57 = sphi 0, %s56
      %s73 = sphi 0, %s57
      %s77 = sphi 0, %s77
      %s79 = sphi 0, %s77
      %s80 = sphi 0, %s79
      %s94 = sphi 0, %s80
      %s98 = sphi 0, %s98
      %s100 = sphi 0, %s98
      %s101 = sphi 0, %s100
      %s115 = sphi 0, %s101
      %s119 = sphi 0, %s119
      %s121 = sphi 0, %s119
      %s122 = sphi 0, %s121
      %s136 = sphi 0, %s122
      %s140 = sphi 0, %s140
      %s142 = sphi 0, %s140
      %s143 = sphi 0, %s142
      %s157 = sphi 0, %s143
      %s161 = sphi 0, %s161
      %s163 = sphi 0, %s161
      %s164 = sphi 0, %s163
      %s178 = sphi 0, %s164
      %s182 = sphi 0, %s182
      %s184 = sphi 0, %s182
      %s185 = sphi 0, %s184
      %s199 = sphi 0, %s185
      %s205 = sphi 0, %s207
      %s208 = sphi 0, %s205
      %s209 = sphi 0, %s208
      %s225 = sphi 0, %s209
    $region4: #{tpu_custom_call.1} parent=1 // loop_header_branch
      %20 = sbr.rel (%p18) target = $region8
    $region5: #{tpu_custom_call.1} parent=1 // loop_body
      %s22 = ssub.s32 %s17, 1
      %s23 = ssub.s32 %s17, 2
      %s24 = sadd.s32 %s17, 1
      %s25 = ssub.s32 %s17, %s24
      %p26 = scmp.eq.s32.totalorder %s25, 0
      %s28 = sadd.s32 %s27, 1
      %s29 = scalar_select %p26, %s27, %s28
      %p32 = pneg %p26
      %p33 = scmp.eq.s32.totalorder %s17, 1
      %p34 = por %p32, %p33
      %p35 = scmp.ne.s32.totalorder %s27, %s30
      %p36 = scmp.eq.s32.totalorder %s17, 0
      %p37 = por %p35, %p36
      %p38 = scmp.ne.s32.totalorder %s27, %s30
      %p39 = scmp.eq.s32.totalorder %s22, 1
      %p40 = por %p38, %p39
      %p41 = scmp.ne.s32.totalorder %s30, %s31
      %p42 = scmp.eq.s32.totalorder %s22, 0
      %p43 = por %p41, %p42
      %p44 = scmp.ne.s32.totalorder %s30, %s31
      %p45 = scmp.eq.s32.totalorder %s23, 1
      %p46 = por %p44, %p45
      %p48 = scmp.ne.s32.totalorder %s31, %s47
      %p49 = scmp.eq.s32.totalorder %s23, 0
      %p50 = por %p48, %p49
      %s51 = ssub.s32 %s17, %s24
      %p52 = scmp.eq.s32.totalorder %s51, 0
      %s54 = sadd.s32 %s53, 1
      %s55 = scalar_select %p52, %s53, %s54
      %p58 = pneg %p52
      %p59 = scmp.eq.s32.totalorder %s17, 1
      %p60 = por %p58, %p59
      %p61 = scmp.ne.s32.totalorder %s53, %s56
      %p62 = scmp.eq.s32.totalorder %s17, 0
      %p63 = por %p61, %p62
      %p64 = scmp.ne.s32.totalorder %s53, %s56
      %p65 = scmp.eq.s32.totalorder %s22, 1
      %p66 = por %p64, %p65
      %p67 = scmp.ne.s32.totalorder %s56, %s57
      %p68 = scmp.eq.s32.totalorder %s22, 0
      %p69 = por %p67, %p68
      %p70 = scmp.ne.s32.totalorder %s56, %s57
      %p71 = scmp.eq.s32.totalorder %s23, 1
      %p72 = por %p70, %p71
      %p74 = scmp.ne.s32.totalorder %s57, %s73
      %p75 = scmp.eq.s32.totalorder %s23, 0
      %p76 = por %p74, %p75
      %s78 = sadd.s32 %s77, 1
      %p81 = scmp.eq.s32.totalorder %s17, 1
      %p82 = scmp.ne.s32.totalorder %s77, %s79
      %p83 = scmp.eq.s32.totalorder %s17, 0
      %p84 = por %p82, %p83
      %p85 = scmp.ne.s32.totalorder %s77, %s79
      %p86 = scmp.eq.s32.totalorder %s22, 1
      %p87 = por %p85, %p86
      %p88 = scmp.ne.s32.totalorder %s79, %s80
      %p89 = scmp.eq.s32.totalorder %s22, 0
      %p90 = por %p88, %p89
      %p91 = scmp.ne.s32.totalorder %s79, %s80
      %p92 = scmp.eq.s32.totalorder %s23, 1
      %p93 = por %p91, %p92
      %p95 = scmp.ne.s32.totalorder %s80, %s94
      %p96 = scmp.eq.s32.totalorder %s23, 0
      %p97 = por %p95, %p96
      %s99 = sadd.s32 %s98, 1
      %p102 = scmp.eq.s32.totalorder %s17, 1
      %p103 = scmp.ne.s32.totalorder %s98, %s100
      %p104 = scmp.eq.s32.totalorder %s17, 0
      %p105 = por %p103, %p104
      %p106 = scmp.ne.s32.totalorder %s98, %s100
      %p107 = scmp.eq.s32.totalorder %s22, 1
      %p108 = por %p106, %p107
      %p109 = scmp.ne.s32.totalorder %s100, %s101
      %p110 = scmp.eq.s32.totalorder %s22, 0
      %p111 = por %p109, %p110
      %p112 = scmp.ne.s32.totalorder %s100, %s101
      %p113 = scmp.eq.s32.totalorder %s23, 1
      %p114 = por %p112, %p113
      %p116 = scmp.ne.s32.totalorder %s101, %s115
      %p117 = scmp.eq.s32.totalorder %s23, 0
      %p118 = por %p116, %p117
      %s120 = sadd.s32 %s119, 1
      %p123 = scmp.eq.s32.totalorder %s17, 1
      %p124 = scmp.ne.s32.totalorder %s119, %s121
      %p125 = scmp.eq.s32.totalorder %s17, 0
      %p126 = por %p124, %p125
      %p127 = scmp.ne.s32.totalorder %s119, %s121
      %p128 = scmp.eq.s32.totalorder %s22, 1
      %p129 = por %p127, %p128
      %p130 = scmp.ne.s32.totalorder %s121, %s122
      %p131 = scmp.eq.s32.totalorder %s22, 0
      %p132 = por %p130, %p131
      %p133 = scmp.ne.s32.totalorder %s121, %s122
      %p134 = scmp.eq.s32.totalorder %s23, 1
      %p135 = por %p133, %p134
      %p137 = scmp.ne.s32.totalorder %s122, %s136
      %p138 = scmp.eq.s32.totalorder %s23, 0
      %p139 = por %p137, %p138
      %s141 = sadd.s32 %s140, 1
      %p144 = scmp.eq.s32.totalorder %s17, 1
      %p145 = scmp.ne.s32.totalorder %s140, %s142
      %p146 = scmp.eq.s32.totalorder %s17, 0
      %p147 = por %p145, %p146
      %p148 = scmp.ne.s32.totalorder %s140, %s142
      %p149 = scmp.eq.s32.totalorder %s22, 1
      %p150 = por %p148, %p149
      %p151 = scmp.ne.s32.totalorder %s142, %s143
      %p152 = scmp.eq.s32.totalorder %s22, 0
      %p153 = por %p151, %p152
      %p154 = scmp.ne.s32.totalorder %s142, %s143
      %p155 = scmp.eq.s32.totalorder %s23, 1
      %p156 = por %p154, %p155
      %p158 = scmp.ne.s32.totalorder %s143, %s157
      %p159 = scmp.eq.s32.totalorder %s23, 0
      %p160 = por %p158, %p159
      %s162 = sadd.s32 %s161, 1
      %p165 = scmp.eq.s32.totalorder %s17, 1
      %p166 = scmp.ne.s32.totalorder %s161, %s163
      %p167 = scmp.eq.s32.totalorder %s17, 0
      %p168 = por %p166, %p167
      %p169 = scmp.ne.s32.totalorder %s161, %s163
      %p170 = scmp.eq.s32.totalorder %s22, 1
      %p171 = por %p169, %p170
      %p172 = scmp.ne.s32.totalorder %s163, %s164
      %p173 = scmp.eq.s32.totalorder %s22, 0
      %p174 = por %p172, %p173
      %p175 = scmp.ne.s32.totalorder %s163, %s164
      %p176 = scmp.eq.s32.totalorder %s23, 1
      %p177 = por %p175, %p176
      %p179 = scmp.ne.s32.totalorder %s164, %s178
      %p180 = scmp.eq.s32.totalorder %s23, 0
      %p181 = por %p179, %p180
      %s183 = sadd.s32 %s182, 1
      %p186 = scmp.eq.s32.totalorder %s17, 1
      %p187 = scmp.ne.s32.totalorder %s182, %s184
      %p188 = scmp.eq.s32.totalorder %s17, 0
      %p189 = por %p187, %p188
      %p190 = scmp.ne.s32.totalorder %s182, %s184
      %p191 = scmp.eq.s32.totalorder %s22, 1
      %p192 = por %p190, %p191
      %p193 = scmp.ne.s32.totalorder %s184, %s185
      %p194 = scmp.eq.s32.totalorder %s22, 0
      %p195 = por %p193, %p194
      %p196 = scmp.ne.s32.totalorder %s184, %s185
      %p197 = scmp.eq.s32.totalorder %s23, 1
      %p198 = por %p196, %p197
      %p200 = scmp.ne.s32.totalorder %s185, %s199
      %p201 = scmp.eq.s32.totalorder %s23, 0
      %p202 = por %p200, %p201
      %s203 = ssub.s32 %s17, %s24
      %p204 = scmp.eq.s32.totalorder %s203, 0
      %s206 = sadd.s32 %s205, 1
      %s207 = scalar_select %p204, %s205, %s206
      %p210 = pneg %p204
      %p211 = scmp.eq.s32.totalorder %s17, 1
      %p212 = por %p210, %p211
      %p213 = scmp.ne.s32.totalorder %s205, %s208
      %p214 = scmp.eq.s32.totalorder %s17, 0
      %p215 = por %p213, %p214
      %p216 = scmp.ne.s32.totalorder %s205, %s208
      %p217 = scmp.eq.s32.totalorder %s22, 1
      %p218 = por %p216, %p217
      %p219 = scmp.ne.s32.totalorder %s208, %s209
      %p220 = scmp.eq.s32.totalorder %s22, 0
      %p221 = por %p219, %p220
      %p222 = scmp.ne.s32.totalorder %s208, %s209
      %p223 = scmp.eq.s32.totalorder %s23, 1
      %p224 = por %p222, %p223
      %p226 = scmp.ne.s32.totalorder %s209, %s225
      %p227 = scmp.eq.s32.totalorder %s23, 0
      %p228 = por %p226, %p227
      %p229 = scmp.le.s32.totalorder 1, %s17
      %p230 = scmp.lt.s32.totalorder %s17, 3
      %p231 = pnand %p229, %p230
      %p232 = pneg %p231
      // Predicated region
      $region9: #{tpu_custom_call.1} parent=5 // pred_check
        _
      $region10: #{tpu_custom_call.1} parent=5 // pred_check_branch
        %234 = sbr.rel (%p231) target = $region12
      $region11: #{tpu_custom_call.1} parent=5 // pred_region
        %s235 = ssub.s32 %s17, 1
        // Predicated region
        $region13: #{tpu_custom_call.1} parent=11 // pred_check
          %p236 = pneg %p90
        $region14: #{tpu_custom_call.1} parent=11 // pred_check_branch
          %238 = sbr.rel (%p236) target = $region16
        $region15: #{tpu_custom_call.1} parent=11 // pred_region
          _
        $region16: #{tpu_custom_call.1} parent=11 // pred_fallthru
          _
        // Predicated region
        $region17: #{tpu_custom_call.1} parent=11 // pred_check
          %p239 = pneg %p111
        $region18: #{tpu_custom_call.1} parent=11 // pred_check_branch
          %241 = sbr.rel (%p239) target = $region20
        $region19: #{tpu_custom_call.1} parent=11 // pred_region
          _
        $region20: #{tpu_custom_call.1} parent=11 // pred_fallthru
          _
        // Predicated region
        $region21: #{tpu_custom_call.1} parent=11 // pred_check
          %p242 = pneg %p132
        $region22: #{tpu_custom_call.1} parent=11 // pred_check_branch
          %244 = sbr.rel (%p242) target = $region24
        $region23: #{tpu_custom_call.1} parent=11 // pred_region
          _
        $region24: #{tpu_custom_call.1} parent=11 // pred_fallthru
          _
        // Predicated region
        $region25: #{tpu_custom_call.1} parent=11 // pred_check
          %p245 = pneg %p153
        $region26: #{tpu_custom_call.1} parent=11 // pred_check_branch
          %247 = sbr.rel (%p245) target = $region28
        $region27: #{tpu_custom_call.1} parent=11 // pred_region
          _
        $region28: #{tpu_custom_call.1} parent=11 // pred_fallthru
          _
        // Predicated region
        $region29: #{tpu_custom_call.1} parent=11 // pred_check
          %p248 = pneg %p174
        $region30: #{tpu_custom_call.1} parent=11 // pred_check_branch
          %250 = sbr.rel (%p248) target = $region32
        $region31: #{tpu_custom_call.1} parent=11 // pred_region
          _
        $region32: #{tpu_custom_call.1} parent=11 // pred_fallthru
          _
        // Predicated region
        $region33: #{tpu_custom_call.1} parent=11 // pred_check
          %p251 = pneg %p195
        $region34: #{tpu_custom_call.1} parent=11 // pred_check_branch
          %253 = sbr.rel (%p251) target = $region36
        $region35: #{tpu_custom_call.1} parent=11 // pred_region
          _
        $region36: #{tpu_custom_call.1} parent=11 // pred_fallthru
          _
      $region12: #{tpu_custom_call.1} parent=5 // pred_fallthru
        _
      %p254 = scmp.lt.s32.totalorder %s17, 2
      // Predicated region
      $region37: #{tpu_custom_call.1} parent=5 // pred_check
        %p255 = pneg %p254
      $region38: #{tpu_custom_call.1} parent=5 // pred_check_branch
        %257 = sbr.rel (%p255) target = $region40
      $region39: #{tpu_custom_call.1} parent=5 // pred_region
        // Predicated region
        $region41: #{tpu_custom_call.1} parent=39 // pred_check
          %p258 = pneg %p37
        $region42: #{tpu_custom_call.1} parent=39 // pred_check_branch
          %260 = sbr.rel (%p258) target = $region44
        $region43: #{tpu_custom_call.1} parent=39 // pred_region
          %p261 = scmp.lt.s32.totalorder %s17, 1
          %s262 = scalar_select %p261, %s17, 1
          %s263 = smul.addr %s262, 8
          %s264 = scalar_lea.vmem %s0, %s263
        $region44: #{tpu_custom_call.1} parent=39 // pred_fallthru
          _
        // Predicated region
        $region45: #{tpu_custom_call.1} parent=39 // pred_check
          %p265 = pneg %p63
        $region46: #{tpu_custom_call.1} parent=39 // pred_check_branch
          %267 = sbr.rel (%p265) target = $region48
        $region47: #{tpu_custom_call.1} parent=39 // pred_region
          %p268 = scmp.lt.s32.totalorder %s17, 1
          %s269 = scalar_select %p268, %s17, 1
          %s270 = smul.addr %s269, 8
          %s271 = scalar_lea.vmem %s1, %s270
        $region48: #{tpu_custom_call.1} parent=39 // pred_fallthru
          _
      $region40: #{tpu_custom_call.1} parent=5 // pred_fallthru
        _
      %p272 = scmp.le.s32.totalorder 1, %s17
      %p273 = scmp.lt.s32.totalorder %s17, 3
      %p274 = pnand %p272, %p273
      %p275 = pneg %p274
      // Predicated region
      $region49: #{tpu_custom_call.1} parent=5 // pred_check
        _
      $region50: #{tpu_custom_call.1} parent=5 // pred_check_branch
        %277 = sbr.rel (%p274) target = $region52
      $region51: #{tpu_custom_call.1} parent=5 // pred_region
        %s278 = ssub.s32 %s17, 1
        %p279 = scmp.lt.s32.totalorder %s22, 1
        %s280 = scalar_select %p279, %s22, 1
        %s281 = smul.addr %s280, 8
        %s282 = scalar_lea.vmem %s0, %s281
        %p283 = pneg %p43
        %p284 = pneg %p40
        %p285 = scmp.lt.s32.totalorder %s22, 1
        %s286 = scalar_select %p285, %s22, 1
        %s287 = smul.addr %s286, 8
        %s288 = scalar_lea.vmem %s1, %s287
        %p289 = pneg %p69
        %p290 = pneg %p66
        %p291 = pneg %p90
        %p292 = pneg %p87
        %p293 = pneg %p111
        %p294 = pneg %p108
        %p295 = pneg %p132
        %p296 = pneg %p129
        %p297 = pneg %p153
        %p298 = pneg %p150
        %p299 = pneg %p174
        %p300 = pneg %p171
        %p301 = pneg %p195
        %p302 = pneg %p192
        %p303 = pneg %p221
        %p304 = pneg %p218
        %s305 = sand.u32 %s208, 1
        %s306 = scalar_lea.sflag [#allocation3], %s305
        %s307 = sand.u32 %s208, 1
        %s308 = smul.addr %s307, 8
        %s309 = scalar_lea.vmem [#allocation2], %s308
        %p310 = scmp.lt.s32.totalorder %s22, 1
        %s311 = scalar_select %p310, %s22, 1
        %s312 = smul.addr %s311, 8
        %s313 = scalar_lea.vmem %s0, %s312
        %p314 = scmp.lt.s32.totalorder %s22, 1
        %s315 = scalar_select %p314, %s22, 1
        %s316 = smul.addr %s315, 8
        %s317 = scalar_lea.vmem %s1, %s316
        %v318 = vld [vmem:[%s313] sm:$0xff]
        %v319 = vld [vmem:[%s2] sm:$0xff]
        %vm320 = vcmask 261120
        %v321 = vsel %vm320, %v318, 0.0
        %322 = vadd.xlane.f32.xlu0 %v321
        %v323 = vpop.xlane.xlu0 %322
        %v324 = vrcp.pop 32.0
        %v325 = vmul.f32 32.0, %v324
        %v326 = vsub.f32 1.0, %v325
        %v327 = vmul.f32 %v324, %v326
        %v328 = vadd.f32 %v324, %v327
        %vm329 = vweird.f32 %v324
        %v330 = vsel %vm329, %v324, %v328
        %v331 = vmul.f32 %v323, %v330
        %v332 = vsub.f32 %v318, %v331
        %v333 = vmul.f32 %v332, %v332
        %v334 = vsel %vm320, %v333, 0.0
        %335 = vadd.xlane.f32.xlu0 %v334
        %v336 = vpop.xlane.xlu0 %335
        %v337 = vmul.f32 %v336, %v330
        %v338 = vadd.f32 %v337, 1e-06
        %v339 = vrsqrt.pop %v338
        %v340 = vmul.f32 %v339, %v338
        %v341 = vmul.f32 %v340, %v339
        %v342 = vmul.f32 0.5, %v341
        %v343 = vsub.f32 1.5, %v342
        %v344 = vmul.f32 %v339, %v343
        %vm345 = vweird.f32 %v338
        %vm346 = vweird.f32 %v339
        %vm347 = vmor %vm345, %vm346
        %v348 = vsel %vm347, %v339, %v344
        %v349 = vmul.f32 %v332, %v348
        %v350 = vperm.slane %v319, 0
        %v351 = vmul.f32 %v349, %v350
        %v352 = vperm.slane %v319, 1
        %v353 = vadd.f32 %v351, %v352
        %v354 = vld [vmem:[%s3] sm:$0xff]
        %v355 = vld [vmem:[%s3 + $0x8] sm:$0xff]
        %v356 = vld [vmem:[%s3 + $0x10] sm:$0xff]
        %v357 = vld [vmem:[%s3 + $0x18] sm:$0xff]
        %v358 = vld [vmem:[%s3 + $0x20] sm:$0xff]
        %v359 = vld [vmem:[%s3 + $0x28] sm:$0xff]
        %v360 = vld [vmem:[%s3 + $0x30] sm:$0xff]
        %v361 = vld [vmem:[%s3 + $0x38] sm:$0xff]
        %v362 = vld [vmem:[%s3 + $0x40] sm:$0xff]
        %v363 = vld [vmem:[%s3 + $0x48] sm:$0xff]
        %v364 = vld [vmem:[%s3 + $0x50] sm:$0xff]
        %v365 = vld [vmem:[%s3 + $0x58] sm:$0xff]
        %v366 = vld [vmem:[%s3 + $0x60] sm:$0xff]
        %v367 = vld [vmem:[%s3 + $0x68] sm:$0xff]
        %v368 = vld [vmem:[%s3 + $0x70] sm:$0xff]
        %v369 = vld [vmem:[%s3 + $0x78] sm:$0xff]
        %v370 = vld [vmem:[%s3 + $0x80] sm:$0xff]
        %v371 = vld [vmem:[%s3 + $0x88] sm:$0xff]
        %v372 = vld [vmem:[%s3 + $0x90] sm:$0xff]
        %v373 = vld [vmem:[%s3 + $0x98] sm:$0xff]
        %v374 = vld [vmem:[%s3 + $0xa0] sm:$0xff]
        %v375 = vld [vmem:[%s3 + $0xa8] sm:$0xff]
        %v376 = vld [vmem:[%s3 + $0xb0] sm:$0xff]
        %v377 = vld [vmem:[%s3 + $0xb8] sm:$0xff]
        %v378 = vld [vmem:[%s3 + $0xc0] sm:$0xff]
        %v379 = vld [vmem:[%s3 + $0xc8] sm:$0xff]
        %v380 = vld [vmem:[%s3 + $0xd0] sm:$0xff]
        %v381 = vld [vmem:[%s3 + $0xd8] sm:$0xff]
        %v382 = vld [vmem:[%s3 + $0xe0] sm:$0xff]
        %v383 = vld [vmem:[%s3 + $0xe8] sm:$0xff]
        %v384 = vld [vmem:[%s3 + $0xf0] sm:$0xff]
        %v385 = vld [vmem:[%s3 + $0xf8] sm:$0xff]
        %v386 = vld [vmem:[%s3 + $0x100] sm:$0xff]
        %v387 = vld [vmem:[%s3 + $0x108] sm:$0xff]
        %v388 = vld [vmem:[%s3 + $0x110] sm:$0xff]
        %v389 = vld [vmem:[%s3 + $0x118] sm:$0xff]
        %v390 = vld [vmem:[%s3 + $0x120] sm:$0xff]
        %v391 = vld [vmem:[%s3 + $0x128] sm:$0xff]
        %v392 = vld [vmem:[%s3 + $0x130] sm:$0xff]
        %v393 = vld [vmem:[%s3 + $0x138] sm:$0xff]
        %v394 = vld [vmem:[%s3 + $0x140] sm:$0xff]
        %v395 = vld [vmem:[%s3 + $0x148] sm:$0xff]
        %v396 = vld [vmem:[%s3 + $0x150] sm:$0xff]
        %v397 = vld [vmem:[%s3 + $0x158] sm:$0xff]
        %v398 = vld [vmem:[%s3 + $0x160] sm:$0xff]
        %v399 = vld [vmem:[%s3 + $0x168] sm:$0xff]
        %v400 = vld [vmem:[%s3 + $0x170] sm:$0xff]
        %v401 = vld [vmem:[%s3 + $0x178] sm:$0xff]
        %v402 = vld [vmem:[%s3 + $0x180] sm:$0xff]
        %v403 = vld [vmem:[%s3 + $0x188] sm:$0xff]
        %v404 = vld [vmem:[%s3 + $0x190] sm:$0xff]
        %v405 = vld [vmem:[%s3 + $0x198] sm:$0xff]
        %v406 = vld [vmem:[%s3 + $0x1a0] sm:$0xff]
        %v407 = vld [vmem:[%s3 + $0x1a8] sm:$0xff]
        %v408 = vld [vmem:[%s3 + $0x1b0] sm:$0xff]
        %v409 = vld [vmem:[%s3 + $0x1b8] sm:$0xff]
        %v410 = vld [vmem:[%s3 + $0x1c0] sm:$0xff]
        %v411 = vld [vmem:[%s3 + $0x1c8] sm:$0xff]
        %v412 = vld [vmem:[%s3 + $0x1d0] sm:$0xff]
        %v413 = vld [vmem:[%s3 + $0x1d8] sm:$0xff]
        %v414 = vld [vmem:[%s3 + $0x1e0] sm:$0xff]
        %v415 = vld [vmem:[%s3 + $0x1e8] sm:$0xff]
        %v416 = vld [vmem:[%s3 + $0x1f0] sm:$0xff]
        %v417 = vld [vmem:[%s3 + $0x1f8] sm:$0xff]
        %v418 = vld [vmem:[%s3 + $0x200] sm:$0xff]
        %v419 = vld [vmem:[%s3 + $0x208] sm:$0xff]
        %v420 = vld [vmem:[%s3 + $0x210] sm:$0xff]
        %v421 = vld [vmem:[%s3 + $0x218] sm:$0xff]
        %v422 = vld [vmem:[%s3 + $0x220] sm:$0xff]
        %v423 = vld [vmem:[%s3 + $0x228] sm:$0xff]
        %v424 = vld [vmem:[%s3 + $0x230] sm:$0xff]
        %v425 = vld [vmem:[%s3 + $0x238] sm:$0xff]
        %v426 = vld [vmem:[%s3 + $0x240] sm:$0xff]
        %v427 = vld [vmem:[%s3 + $0x248] sm:$0xff]
        %v428 = vld [vmem:[%s3 + $0x250] sm:$0xff]
        %v429 = vld [vmem:[%s3 + $0x258] sm:$0xff]
        %v430 = vld [vmem:[%s3 + $0x260] sm:$0xff]
        %v431 = vld [vmem:[%s3 + $0x268] sm:$0xff]
        %v432 = vld [vmem:[%s3 + $0x270] sm:$0xff]
        %v433 = vld [vmem:[%s3 + $0x278] sm:$0xff]
        %v434 = vld [vmem:[%s3 + $0x280] sm:$0xff]
        %v435 = vld [vmem:[%s3 + $0x288] sm:$0xff]
        %v436 = vld [vmem:[%s3 + $0x290] sm:$0xff]
        %v437 = vld [vmem:[%s3 + $0x298] sm:$0xff]
        %v438 = vld [vmem:[%s3 + $0x2a0] sm:$0xff]
        %v439 = vld [vmem:[%s3 + $0x2a8] sm:$0xff]
        %v440 = vld [vmem:[%s3 + $0x2b0] sm:$0xff]
        %v441 = vld [vmem:[%s3 + $0x2b8] sm:$0xff]
        %v442 = vld [vmem:[%s3 + $0x2c0] sm:$0xff]
        %v443 = vld [vmem:[%s3 + $0x2c8] sm:$0xff]
        %v444 = vld [vmem:[%s3 + $0x2d0] sm:$0xff]
        %v445 = vld [vmem:[%s3 + $0x2d8] sm:$0xff]
        %v446 = vld [vmem:[%s3 + $0x2e0] sm:$0xff]
        %v447 = vld [vmem:[%s3 + $0x2e8] sm:$0xff]
        %v448 = vld [vmem:[%s3 + $0x2f0] sm:$0xff]
        %v449 = vld [vmem:[%s3 + $0x2f8] sm:$0xff]
        %v450 = vld [vmem:[%s4] sm:$0x1]
        %v451 = vld [vmem:[%s4 + $0x1] sm:$0x1]
        %v452 = vld [vmem:[%s4 + $0x2] sm:$0x1]
        %v453 = vld [vmem:[%s4 + $0x3] sm:$0x1]
        %v454 = vld [vmem:[%s4 + $0x4] sm:$0x1]
        %v455 = vld [vmem:[%s4 + $0x5] sm:$0x1]
        %v456 = vld [vmem:[%s4 + $0x6] sm:$0x1]
        %v457 = vld [vmem:[%s4 + $0x7] sm:$0x1]
        %v458 = vld [vmem:[%s4 + $0x8] sm:$0x1]
        %v459 = vld [vmem:[%s4 + $0x9] sm:$0x1]
        %v460 = vld [vmem:[%s4 + $0xa] sm:$0x1]
        %v461 = vld [vmem:[%s4 + $0xb] sm:$0x1]
        %v462 = vld [vmem:[%s4 + $0xc] sm:$0x1]
        %v463 = vld [vmem:[%s4 + $0xd] sm:$0x1]
        %v464 = vld [vmem:[%s4 + $0xe] sm:$0x1]
        %v465 = vld [vmem:[%s4 + $0xf] sm:$0x1]
        %v466 = vld [vmem:[%s4 + $0x10] sm:$0x1]
        %v467 = vld [vmem:[%s4 + $0x11] sm:$0x1]
        %v468 = vld [vmem:[%s4 + $0x12] sm:$0x1]
        %v469 = vld [vmem:[%s4 + $0x13] sm:$0x1]
        %v470 = vld [vmem:[%s4 + $0x14] sm:$0x1]
        %v471 = vld [vmem:[%s4 + $0x15] sm:$0x1]
        %v472 = vld [vmem:[%s4 + $0x16] sm:$0x1]
        %v473 = vld [vmem:[%s4 + $0x17] sm:$0x1]
        %v498 = vperm.slane %v450, 0
        %v499 = vperm.slane %v451, 0
        %v500 = vperm.slane %v452, 0
        %v501 = vperm.slane %v453, 0
        %v502 = vperm.slane %v454, 0
        %v503 = vperm.slane %v455, 0
        %v504 = vperm.slane %v456, 0
        %v505 = vperm.slane %v457, 0
        %v506 = vperm.slane %v458, 0
        %v507 = vperm.slane %v459, 0
        %v508 = vperm.slane %v460, 0
        %v509 = vperm.slane %v461, 0
        %v510 = vperm.slane %v462, 0
        %v511 = vperm.slane %v463, 0
        %v512 = vperm.slane %v464, 0
        %v513 = vperm.slane %v465, 0
        %v514 = vperm.slane %v466, 0
        %v515 = vperm.slane %v467, 0
        %v516 = vperm.slane %v468, 0
        %v517 = vperm.slane %v469, 0
        %v518 = vperm.slane %v470, 0
        %v519 = vperm.slane %v471, 0
        %v520 = vperm.slane %v472, 0
        %v521 = vperm.slane %v473, 0
        %v547 = vsel %vm320, %v353, 0
        %549 = vmatpush.msra.mxu0 0.0
        %550 = vmatpush.msra.mxu0 0.0
        %551 = vmatpush.msra.mxu0 0.0
        %552 = vmatpush.msra.mxu0 0.0
        %553 = vmatpush.msra.mxu0 0.0
        %554 = vmatpush.msra.mxu0 0.0
        %555 = vmatpush.msra.mxu0 0.0
        %556 = vmatpush.msra.mxu0 0.0
        %557 = vmatpush.msra.mxu0 0.0
        %558 = vmatpush.msra.mxu0 0.0
        %559 = vmatpush.msra.mxu0 0.0
        %560 = vmatpush.msra.mxu0 0.0
        %561 = vmatpush.msra.mxu0 %v357
        %562 = vmatpush.msra.mxu0 %v356
        %563 = vmatpush.msra.mxu0 %v355
        %564 = vmatpush.msra.mxu0 %v354
        %565 = vmatmul.f32.gmra.mxu0 %v547
        %v566 = vpop.f32.mrf.mxu0
        %v567 = vadd.f32 %v498, %v566
        %568 = vdwg.mxu0
        %569 = vmatpush.msra.mxu0 0.0
        %570 = vmatpush.msra.mxu0 0.0
        %571 = vmatpush.msra.mxu0 0.0
        %572 = vmatpush.msra.mxu0 0.0
        %573 = vmatpush.msra.mxu0 0.0
        %574 = vmatpush.msra.mxu0 0.0
        %575 = vmatpush.msra.mxu0 0.0
        %576 = vmatpush.msra.mxu0 0.0
        %577 = vmatpush.msra.mxu0 0.0
        %578 = vmatpush.msra.mxu0 0.0
        %579 = vmatpush.msra.mxu0 0.0
        %580 = vmatpush.msra.mxu0 0.0
        %581 = vmatpush.msra.mxu0 %v361
        %582 = vmatpush.msra.mxu0 %v360
        %583 = vmatpush.msra.mxu0 %v359
        %584 = vmatpush.msra.mxu0 %v358
        %585 = vmatmul.f32.gmra.mxu0 %v547
        %v586 = vpop.f32.mrf.mxu0
        %v587 = vadd.f32 %v499, %v586
        %588 = vdwg.mxu0
        %589 = vmatpush.msra.mxu0 0.0
        %590 = vmatpush.msra.mxu0 0.0
        %591 = vmatpush.msra.mxu0 0.0
        %592 = vmatpush.msra.mxu0 0.0
        %593 = vmatpush.msra.mxu0 0.0
        %594 = vmatpush.msra.mxu0 0.0
        %595 = vmatpush.msra.mxu0 0.0
        %596 = vmatpush.msra.mxu0 0.0
        %597 = vmatpush.msra.mxu0 0.0
        %598 = vmatpush.msra.mxu0 0.0
        %599 = vmatpush.msra.mxu0 0.0
        %600 = vmatpush.msra.mxu0 0.0
        %601 = vmatpush.msra.mxu0 %v365
        %602 = vmatpush.msra.mxu0 %v364
        %603 = vmatpush.msra.mxu0 %v363
        %604 = vmatpush.msra.mxu0 %v362
        %605 = vmatmul.f32.gmra.mxu0 %v547
        %v606 = vpop.f32.mrf.mxu0
        %v607 = vadd.f32 %v500, %v606
        %608 = vdwg.mxu0
        %609 = vmatpush.msra.mxu0 0.0
        %610 = vmatpush.msra.mxu0 0.0
        %611 = vmatpush.msra.mxu0 0.0
        %612 = vmatpush.msra.mxu0 0.0
        %613 = vmatpush.msra.mxu0 0.0
        %614 = vmatpush.msra.mxu0 0.0
        %615 = vmatpush.msra.mxu0 0.0
        %616 = vmatpush.msra.mxu0 0.0
        %617 = vmatpush.msra.mxu0 0.0
        %618 = vmatpush.msra.mxu0 0.0
        %619 = vmatpush.msra.mxu0 0.0
        %620 = vmatpush.msra.mxu0 0.0
        %621 = vmatpush.msra.mxu0 %v369
        %622 = vmatpush.msra.mxu0 %v368
        %623 = vmatpush.msra.mxu0 %v367
        %624 = vmatpush.msra.mxu0 %v366
        %625 = vmatmul.f32.gmra.mxu0 %v547
        %v626 = vpop.f32.mrf.mxu0
        %v627 = vadd.f32 %v501, %v626
        %628 = vdwg.mxu0
        %629 = vmatpush.msra.mxu0 0.0
        %630 = vmatpush.msra.mxu0 0.0
        %631 = vmatpush.msra.mxu0 0.0
        %632 = vmatpush.msra.mxu0 0.0
        %633 = vmatpush.msra.mxu0 0.0
        %634 = vmatpush.msra.mxu0 0.0
        %635 = vmatpush.msra.mxu0 0.0
        %636 = vmatpush.msra.mxu0 0.0
        %637 = vmatpush.msra.mxu0 0.0
        %638 = vmatpush.msra.mxu0 0.0
        %639 = vmatpush.msra.mxu0 0.0
        %640 = vmatpush.msra.mxu0 0.0
        %641 = vmatpush.msra.mxu0 %v373
        %642 = vmatpush.msra.mxu0 %v372
        %643 = vmatpush.msra.mxu0 %v371
        %644 = vmatpush.msra.mxu0 %v370
        %645 = vmatmul.f32.gmra.mxu0 %v547
        %v646 = vpop.f32.mrf.mxu0
        %v647 = vadd.f32 %v502, %v646
        %648 = vdwg.mxu0
        %649 = vmatpush.msra.mxu0 0.0
        %650 = vmatpush.msra.mxu0 0.0
        %651 = vmatpush.msra.mxu0 0.0
        %652 = vmatpush.msra.mxu0 0.0
        %653 = vmatpush.msra.mxu0 0.0
        %654 = vmatpush.msra.mxu0 0.0
        %655 = vmatpush.msra.mxu0 0.0
        %656 = vmatpush.msra.mxu0 0.0
        %657 = vmatpush.msra.mxu0 0.0
        %658 = vmatpush.msra.mxu0 0.0
        %659 = vmatpush.msra.mxu0 0.0
        %660 = vmatpush.msra.mxu0 0.0
        %661 = vmatpush.msra.mxu0 %v377
        %662 = vmatpush.msra.mxu0 %v376
        %663 = vmatpush.msra.mxu0 %v375
        %664 = vmatpush.msra.mxu0 %v374
        %665 = vmatmul.f32.gmra.mxu0 %v547
        %v666 = vpop.f32.mrf.mxu0
        %v667 = vadd.f32 %v503, %v666
        %668 = vdwg.mxu0
        %669 = vmatpush.msra.mxu0 0.0
        %670 = vmatpush.msra.mxu0 0.0
        %671 = vmatpush.msra.mxu0 0.0
        %672 = vmatpush.msra.mxu0 0.0
        %673 = vmatpush.msra.mxu0 0.0
        %674 = vmatpush.msra.mxu0 0.0
        %675 = vmatpush.msra.mxu0 0.0
        %676 = vmatpush.msra.mxu0 0.0
        %677 = vmatpush.msra.mxu0 0.0
        %678 = vmatpush.msra.mxu0 0.0
        %679 = vmatpush.msra.mxu0 0.0
        %680 = vmatpush.msra.mxu0 0.0
        %681 = vmatpush.msra.mxu0 %v381
        %682 = vmatpush.msra.mxu0 %v380
        %683 = vmatpush.msra.mxu0 %v379
        %684 = vmatpush.msra.mxu0 %v378
        %685 = vmatmul.f32.gmra.mxu0 %v547
        %v686 = vpop.f32.mrf.mxu0
        %v687 = vadd.f32 %v504, %v686
        %688 = vdwg.mxu0
        %689 = vmatpush.msra.mxu0 0.0
        %690 = vmatpush.msra.mxu0 0.0
        %691 = vmatpush.msra.mxu0 0.0
        %692 = vmatpush.msra.mxu0 0.0
        %693 = vmatpush.msra.mxu0 0.0
        %694 = vmatpush.msra.mxu0 0.0
        %695 = vmatpush.msra.mxu0 0.0
        %696 = vmatpush.msra.mxu0 0.0
        %697 = vmatpush.msra.mxu0 0.0
        %698 = vmatpush.msra.mxu0 0.0
        %699 = vmatpush.msra.mxu0 0.0
        %700 = vmatpush.msra.mxu0 0.0
        %701 = vmatpush.msra.mxu0 %v385
        %702 = vmatpush.msra.mxu0 %v384
        %703 = vmatpush.msra.mxu0 %v383
        %704 = vmatpush.msra.mxu0 %v382
        %705 = vmatmul.f32.gmra.mxu0 %v547
        %v706 = vpop.f32.mrf.mxu0
        %v707 = vadd.f32 %v505, %v706
        %708 = vdwg.mxu0
        %709 = vmatpush.msra.mxu0 0.0
        %710 = vmatpush.msra.mxu0 0.0
        %711 = vmatpush.msra.mxu0 0.0
        %712 = vmatpush.msra.mxu0 0.0
        %713 = vmatpush.msra.mxu0 0.0
        %714 = vmatpush.msra.mxu0 0.0
        %715 = vmatpush.msra.mxu0 0.0
        %716 = vmatpush.msra.mxu0 0.0
        %717 = vmatpush.msra.mxu0 0.0
        %718 = vmatpush.msra.mxu0 0.0
        %719 = vmatpush.msra.mxu0 0.0
        %720 = vmatpush.msra.mxu0 0.0
        %721 = vmatpush.msra.mxu0 %v389
        %722 = vmatpush.msra.mxu0 %v388
        %723 = vmatpush.msra.mxu0 %v387
        %724 = vmatpush.msra.mxu0 %v386
        %725 = vmatmul.f32.gmra.mxu0 %v547
        %v726 = vpop.f32.mrf.mxu0
        %v727 = vadd.f32 %v506, %v726
        %728 = vdwg.mxu0
        %729 = vmatpush.msra.mxu0 0.0
        %730 = vmatpush.msra.mxu0 0.0
        %731 = vmatpush.msra.mxu0 0.0
        %732 = vmatpush.msra.mxu0 0.0
        %733 = vmatpush.msra.mxu0 0.0
        %734 = vmatpush.msra.mxu0 0.0
        %735 = vmatpush.msra.mxu0 0.0
        %736 = vmatpush.msra.mxu0 0.0
        %737 = vmatpush.msra.mxu0 0.0
        %738 = vmatpush.msra.mxu0 0.0
        %739 = vmatpush.msra.mxu0 0.0
        %740 = vmatpush.msra.mxu0 0.0
        %741 = vmatpush.msra.mxu0 %v393
        %742 = vmatpush.msra.mxu0 %v392
        %743 = vmatpush.msra.mxu0 %v391
        %744 = vmatpush.msra.mxu0 %v390
        %745 = vmatmul.f32.gmra.mxu0 %v547
        %v746 = vpop.f32.mrf.mxu0
        %v747 = vadd.f32 %v507, %v746
        %748 = vdwg.mxu0
        %749 = vmatpush.msra.mxu0 0.0
        %750 = vmatpush.msra.mxu0 0.0
        %751 = vmatpush.msra.mxu0 0.0
        %752 = vmatpush.msra.mxu0 0.0
        %753 = vmatpush.msra.mxu0 0.0
        %754 = vmatpush.msra.mxu0 0.0
        %755 = vmatpush.msra.mxu0 0.0
        %756 = vmatpush.msra.mxu0 0.0
        %757 = vmatpush.msra.mxu0 0.0
        %758 = vmatpush.msra.mxu0 0.0
        %759 = vmatpush.msra.mxu0 0.0
        %760 = vmatpush.msra.mxu0 0.0
        %761 = vmatpush.msra.mxu0 %v397
        %762 = vmatpush.msra.mxu0 %v396
        %763 = vmatpush.msra.mxu0 %v395
        %764 = vmatpush.msra.mxu0 %v394
        %765 = vmatmul.f32.gmra.mxu0 %v547
        %v766 = vpop.f32.mrf.mxu0
        %v767 = vadd.f32 %v508, %v766
        %768 = vdwg.mxu0
        %769 = vmatpush.msra.mxu0 0.0
        %770 = vmatpush.msra.mxu0 0.0
        %771 = vmatpush.msra.mxu0 0.0
        %772 = vmatpush.msra.mxu0 0.0
        %773 = vmatpush.msra.mxu0 0.0
        %774 = vmatpush.msra.mxu0 0.0
        %775 = vmatpush.msra.mxu0 0.0
        %776 = vmatpush.msra.mxu0 0.0
        %777 = vmatpush.msra.mxu0 0.0
        %778 = vmatpush.msra.mxu0 0.0
        %779 = vmatpush.msra.mxu0 0.0
        %780 = vmatpush.msra.mxu0 0.0
        %781 = vmatpush.msra.mxu0 %v401
        %782 = vmatpush.msra.mxu0 %v400
        %783 = vmatpush.msra.mxu0 %v399
        %784 = vmatpush.msra.mxu0 %v398
        %785 = vmatmul.f32.gmra.mxu0 %v547
        %v786 = vpop.f32.mrf.mxu0
        %v787 = vadd.f32 %v509, %v786
        %788 = vdwg.mxu0
        %789 = vmatpush.msra.mxu0 0.0
        %790 = vmatpush.msra.mxu0 0.0
        %791 = vmatpush.msra.mxu0 0.0
        %792 = vmatpush.msra.mxu0 0.0
        %793 = vmatpush.msra.mxu0 0.0
        %794 = vmatpush.msra.mxu0 0.0
        %795 = vmatpush.msra.mxu0 0.0
        %796 = vmatpush.msra.mxu0 0.0
        %797 = vmatpush.msra.mxu0 0.0
        %798 = vmatpush.msra.mxu0 0.0
        %799 = vmatpush.msra.mxu0 0.0
        %800 = vmatpush.msra.mxu0 0.0
        %801 = vmatpush.msra.mxu0 %v405
        %802 = vmatpush.msra.mxu0 %v404
        %803 = vmatpush.msra.mxu0 %v403
        %804 = vmatpush.msra.mxu0 %v402
        %805 = vmatmul.f32.gmra.mxu0 %v547
        %v806 = vpop.f32.mrf.mxu0
        %v807 = vadd.f32 %v510, %v806
        %808 = vdwg.mxu0
        %809 = vmatpush.msra.mxu0 0.0
        %810 = vmatpush.msra.mxu0 0.0
        %811 = vmatpush.msra.mxu0 0.0
        %812 = vmatpush.msra.mxu0 0.0
        %813 = vmatpush.msra.mxu0 0.0
        %814 = vmatpush.msra.mxu0 0.0
        %815 = vmatpush.msra.mxu0 0.0
        %816 = vmatpush.msra.mxu0 0.0
        %817 = vmatpush.msra.mxu0 0.0
        %818 = vmatpush.msra.mxu0 0.0
        %819 = vmatpush.msra.mxu0 0.0
        %820 = vmatpush.msra.mxu0 0.0
        %821 = vmatpush.msra.mxu0 %v409
        %822 = vmatpush.msra.mxu0 %v408
        %823 = vmatpush.msra.mxu0 %v407
        %824 = vmatpush.msra.mxu0 %v406
        %825 = vmatmul.f32.gmra.mxu0 %v547
        %v826 = vpop.f32.mrf.mxu0
        %v827 = vadd.f32 %v511, %v826
        %828 = vdwg.mxu0
        %829 = vmatpush.msra.mxu0 0.0
        %830 = vmatpush.msra.mxu0 0.0
        %831 = vmatpush.msra.mxu0 0.0
        %832 = vmatpush.msra.mxu0 0.0
        %833 = vmatpush.msra.mxu0 0.0
        %834 = vmatpush.msra.mxu0 0.0
        %835 = vmatpush.msra.mxu0 0.0
        %836 = vmatpush.msra.mxu0 0.0
        %837 = vmatpush.msra.mxu0 0.0
        %838 = vmatpush.msra.mxu0 0.0
        %839 = vmatpush.msra.mxu0 0.0
        %840 = vmatpush.msra.mxu0 0.0
        %841 = vmatpush.msra.mxu0 %v413
        %842 = vmatpush.msra.mxu0 %v412
        %843 = vmatpush.msra.mxu0 %v411
        %844 = vmatpush.msra.mxu0 %v410
        %845 = vmatmul.f32.gmra.mxu0 %v547
        %v846 = vpop.f32.mrf.mxu0
        %v847 = vadd.f32 %v512, %v846
        %848 = vdwg.mxu0
        %849 = vmatpush.msra.mxu0 0.0
        %850 = vmatpush.msra.mxu0 0.0
        %851 = vmatpush.msra.mxu0 0.0
        %852 = vmatpush.msra.mxu0 0.0
        %853 = vmatpush.msra.mxu0 0.0
        %854 = vmatpush.msra.mxu0 0.0
        %855 = vmatpush.msra.mxu0 0.0
        %856 = vmatpush.msra.mxu0 0.0
        %857 = vmatpush.msra.mxu0 0.0
        %858 = vmatpush.msra.mxu0 0.0
        %859 = vmatpush.msra.mxu0 0.0
        %860 = vmatpush.msra.mxu0 0.0
        %861 = vmatpush.msra.mxu0 %v417
        %862 = vmatpush.msra.mxu0 %v416
        %863 = vmatpush.msra.mxu0 %v415
        %864 = vmatpush.msra.mxu0 %v414
        %865 = vmatmul.f32.gmra.mxu0 %v547
        %v866 = vpop.f32.mrf.mxu0
        %v867 = vadd.f32 %v513, %v866
        %868 = vdwg.mxu0
        %869 = vmatpush.msra.mxu0 0.0
        %870 = vmatpush.msra.mxu0 0.0
        %871 = vmatpush.msra.mxu0 0.0
        %872 = vmatpush.msra.mxu0 0.0
        %873 = vmatpush.msra.mxu0 0.0
        %874 = vmatpush.msra.mxu0 0.0
        %875 = vmatpush.msra.mxu0 0.0
        %876 = vmatpush.msra.mxu0 0.0
        %877 = vmatpush.msra.mxu0 0.0
        %878 = vmatpush.msra.mxu0 0.0
        %879 = vmatpush.msra.mxu0 0.0
        %880 = vmatpush.msra.mxu0 0.0
        %881 = vmatpush.msra.mxu0 %v421
        %882 = vmatpush.msra.mxu0 %v420
        %883 = vmatpush.msra.mxu0 %v419
        %884 = vmatpush.msra.mxu0 %v418
        %885 = vmatmul.f32.gmra.mxu0 %v547
        %v886 = vpop.f32.mrf.mxu0
        %v887 = vadd.f32 %v514, %v886
        %888 = vdwg.mxu0
        %889 = vmatpush.msra.mxu0 0.0
        %890 = vmatpush.msra.mxu0 0.0
        %891 = vmatpush.msra.mxu0 0.0
        %892 = vmatpush.msra.mxu0 0.0
        %893 = vmatpush.msra.mxu0 0.0
        %894 = vmatpush.msra.mxu0 0.0
        %895 = vmatpush.msra.mxu0 0.0
        %896 = vmatpush.msra.mxu0 0.0
        %897 = vmatpush.msra.mxu0 0.0
        %898 = vmatpush.msra.mxu0 0.0
        %899 = vmatpush.msra.mxu0 0.0
        %900 = vmatpush.msra.mxu0 0.0
        %901 = vmatpush.msra.mxu0 %v425
        %902 = vmatpush.msra.mxu0 %v424
        %903 = vmatpush.msra.mxu0 %v423
        %904 = vmatpush.msra.mxu0 %v422
        %905 = vmatmul.f32.gmra.mxu0 %v547
        %v906 = vpop.f32.mrf.mxu0
        %v907 = vadd.f32 %v515, %v906
        %908 = vdwg.mxu0
        %909 = vmatpush.msra.mxu0 0.0
        %910 = vmatpush.msra.mxu0 0.0
        %911 = vmatpush.msra.mxu0 0.0
        %912 = vmatpush.msra.mxu0 0.0
        %913 = vmatpush.msra.mxu0 0.0
        %914 = vmatpush.msra.mxu0 0.0
        %915 = vmatpush.msra.mxu0 0.0
        %916 = vmatpush.msra.mxu0 0.0
        %917 = vmatpush.msra.mxu0 0.0
        %918 = vmatpush.msra.mxu0 0.0
        %919 = vmatpush.msra.mxu0 0.0
        %920 = vmatpush.msra.mxu0 0.0
        %921 = vmatpush.msra.mxu0 %v429
        %922 = vmatpush.msra.mxu0 %v428
        %923 = vmatpush.msra.mxu0 %v427
        %924 = vmatpush.msra.mxu0 %v426
        %925 = vmatmul.f32.gmra.mxu0 %v547
        %v926 = vpop.f32.mrf.mxu0
        %v927 = vadd.f32 %v516, %v926
        %928 = vdwg.mxu0
        %929 = vmatpush.msra.mxu0 0.0
        %930 = vmatpush.msra.mxu0 0.0
        %931 = vmatpush.msra.mxu0 0.0
        %932 = vmatpush.msra.mxu0 0.0
        %933 = vmatpush.msra.mxu0 0.0
        %934 = vmatpush.msra.mxu0 0.0
        %935 = vmatpush.msra.mxu0 0.0
        %936 = vmatpush.msra.mxu0 0.0
        %937 = vmatpush.msra.mxu0 0.0
        %938 = vmatpush.msra.mxu0 0.0
        %939 = vmatpush.msra.mxu0 0.0
        %940 = vmatpush.msra.mxu0 0.0
        %941 = vmatpush.msra.mxu0 %v433
        %942 = vmatpush.msra.mxu0 %v432
        %943 = vmatpush.msra.mxu0 %v431
        %944 = vmatpush.msra.mxu0 %v430
        %945 = vmatmul.f32.gmra.mxu0 %v547
        %v946 = vpop.f32.mrf.mxu0
        %v947 = vadd.f32 %v517, %v946
        %948 = vdwg.mxu0
        %949 = vmatpush.msra.mxu0 0.0
        %950 = vmatpush.msra.mxu0 0.0
        %951 = vmatpush.msra.mxu0 0.0
        %952 = vmatpush.msra.mxu0 0.0
        %953 = vmatpush.msra.mxu0 0.0
        %954 = vmatpush.msra.mxu0 0.0
        %955 = vmatpush.msra.mxu0 0.0
        %956 = vmatpush.msra.mxu0 0.0
        %957 = vmatpush.msra.mxu0 0.0
        %958 = vmatpush.msra.mxu0 0.0
        %959 = vmatpush.msra.mxu0 0.0
        %960 = vmatpush.msra.mxu0 0.0
        %961 = vmatpush.msra.mxu0 %v437
        %962 = vmatpush.msra.mxu0 %v436
        %963 = vmatpush.msra.mxu0 %v435
        %964 = vmatpush.msra.mxu0 %v434
        %965 = vmatmul.f32.gmra.mxu0 %v547
        %v966 = vpop.f32.mrf.mxu0
        %v967 = vadd.f32 %v518, %v966
        %968 = vdwg.mxu0
        %969 = vmatpush.msra.mxu0 0.0
        %970 = vmatpush.msra.mxu0 0.0
        %971 = vmatpush.msra.mxu0 0.0
        %972 = vmatpush.msra.mxu0 0.0
        %973 = vmatpush.msra.mxu0 0.0
        %974 = vmatpush.msra.mxu0 0.0
        %975 = vmatpush.msra.mxu0 0.0
        %976 = vmatpush.msra.mxu0 0.0
        %977 = vmatpush.msra.mxu0 0.0
        %978 = vmatpush.msra.mxu0 0.0
        %979 = vmatpush.msra.mxu0 0.0
        %980 = vmatpush.msra.mxu0 0.0
        %981 = vmatpush.msra.mxu0 %v441
        %982 = vmatpush.msra.mxu0 %v440
        %983 = vmatpush.msra.mxu0 %v439
        %984 = vmatpush.msra.mxu0 %v438
        %985 = vmatmul.f32.gmra.mxu0 %v547
        %v986 = vpop.f32.mrf.mxu0
        %v987 = vadd.f32 %v519, %v986
        %988 = vdwg.mxu0
        %989 = vmatpush.msra.mxu0 0.0
        %990 = vmatpush.msra.mxu0 0.0
        %991 = vmatpush.msra.mxu0 0.0
        %992 = vmatpush.msra.mxu0 0.0
        %993 = vmatpush.msra.mxu0 0.0
        %994 = vmatpush.msra.mxu0 0.0
        %995 = vmatpush.msra.mxu0 0.0
        %996 = vmatpush.msra.mxu0 0.0
        %997 = vmatpush.msra.mxu0 0.0
        %998 = vmatpush.msra.mxu0 0.0
        %999 = vmatpush.msra.mxu0 0.0
        %1000 = vmatpush.msra.mxu0 0.0
        %1001 = vmatpush.msra.mxu0 %v445
        %1002 = vmatpush.msra.mxu0 %v444
        %1003 = vmatpush.msra.mxu0 %v443
        %1004 = vmatpush.msra.mxu0 %v442
        %1005 = vmatmul.f32.gmra.mxu0 %v547
        %v1006 = vpop.f32.mrf.mxu0
        %v1007 = vadd.f32 %v520, %v1006
        %1008 = vdwg.mxu0
        %1009 = vmatpush.msra.mxu0 0.0
        %1010 = vmatpush.msra.mxu0 0.0
        %1011 = vmatpush.msra.mxu0 0.0
        %1012 = vmatpush.msra.mxu0 0.0
        %1013 = vmatpush.msra.mxu0 0.0
        %1014 = vmatpush.msra.mxu0 0.0
        %1015 = vmatpush.msra.mxu0 0.0
        %1016 = vmatpush.msra.mxu0 0.0
        %1017 = vmatpush.msra.mxu0 0.0
        %1018 = vmatpush.msra.mxu0 0.0
        %1019 = vmatpush.msra.mxu0 0.0
        %1020 = vmatpush.msra.mxu0 0.0
        %1021 = vmatpush.msra.mxu0 %v449
        %1022 = vmatpush.msra.mxu0 %v448
        %1023 = vmatpush.msra.mxu0 %v447
        %1024 = vmatpush.msra.mxu0 %v446
        %1025 = vmatmul.f32.gmra.mxu0 %v547
        %v1026 = vpop.f32.mrf.mxu0
        %v1027 = vadd.f32 %v521, %v1026
        %1028 = vdwg.mxu0
        %v1029 = vmul.f32 %v567, 0.5
        %v1030 = vmul.f32 %v587, 0.5
        %v1031 = vmul.f32 %v607, 0.5
        %v1032 = vmul.f32 %v627, 0.5
        %v1033 = vmul.f32 %v647, 0.5
        %v1034 = vmul.f32 %v667, 0.5
        %v1035 = vmul.f32 %v687, 0.5
        %v1036 = vmul.f32 %v707, 0.5
        %vm1037 = vcmask 31744
        %v1039 = vsel %vm1037, %v1029, 0
        %v1042 = vsel %vm1037, %v727, 0
        %1044 = vmatpush.xpose.msra.mxu0 0.0
        %1045 = vmatpush.xpose.msra.mxu0 0.0
        %1046 = vmatpush.xpose.msra.mxu0 0.0
        %1047 = vmatpush.xpose.msra.mxu0 0.0
        %1048 = vmatpush.xpose.msra.mxu0 0.0
        %1049 = vmatpush.xpose.msra.mxu0 0.0
        %1050 = vmatpush.xpose.msra.mxu0 0.0
        %1051 = vmatpush.xpose.msra.mxu0 0.0
        %1052 = vmatpush.xpose.msra.mxu0 0.0
        %1053 = vmatpush.xpose.msra.mxu0 0.0
        %1054 = vmatpush.xpose.msra.mxu0 0.0
        %1055 = vmatpush.xpose.msra.mxu0 0.0
        %1056 = vmatpush.xpose.msra.mxu0 0.0
        %1057 = vmatpush.xpose.msra.mxu0 0.0
        %1058 = vmatpush.xpose.msra.mxu0 0.0
        %1059 = vmatpush.xpose.msra.mxu0 %v1042
        %1060 = vmatmul.f32.gmra.mxu0 %v1039
        %v1061 = vpop.f32.mrf.mxu0
        %v1062 = vadd.f32 0.0, %v1061
        %1063 = vdwg.mxu0
        %v1065 = vsel %vm1037, %v1030, 0
        %v1068 = vsel %vm1037, %v747, 0
        %1070 = vmatpush.xpose.msra.mxu0 0.0
        %1071 = vmatpush.xpose.msra.mxu0 0.0
        %1072 = vmatpush.xpose.msra.mxu0 0.0
        %1073 = vmatpush.xpose.msra.mxu0 0.0
        %1074 = vmatpush.xpose.msra.mxu0 0.0
        %1075 = vmatpush.xpose.msra.mxu0 0.0
        %1076 = vmatpush.xpose.msra.mxu0 0.0
        %1077 = vmatpush.xpose.msra.mxu0 0.0
        %1078 = vmatpush.xpose.msra.mxu0 0.0
        %1079 = vmatpush.xpose.msra.mxu0 0.0
        %1080 = vmatpush.xpose.msra.mxu0 0.0
        %1081 = vmatpush.xpose.msra.mxu0 0.0
        %1082 = vmatpush.xpose.msra.mxu0 0.0
        %1083 = vmatpush.xpose.msra.mxu0 0.0
        %1084 = vmatpush.xpose.msra.mxu0 0.0
        %1085 = vmatpush.xpose.msra.mxu0 %v1068
        %1086 = vmatmul.f32.gmra.mxu0 %v1065
        %v1087 = vpop.f32.mrf.mxu0
        %v1088 = vadd.f32 0.0, %v1087
        %1089 = vdwg.mxu0
        %v1091 = vsel %vm1037, %v1031, 0
        %v1094 = vsel %vm1037, %v767, 0
        %1096 = vmatpush.xpose.msra.mxu0 0.0
        %1097 = vmatpush.xpose.msra.mxu0 0.0
        %1098 = vmatpush.xpose.msra.mxu0 0.0
        %1099 = vmatpush.xpose.msra.mxu0 0.0
        %1100 = vmatpush.xpose.msra.mxu0 0.0
        %1101 = vmatpush.xpose.msra.mxu0 0.0
        %1102 = vmatpush.xpose.msra.mxu0 0.0
        %1103 = vmatpush.xpose.msra.mxu0 0.0
        %1104 = vmatpush.xpose.msra.mxu0 0.0
        %1105 = vmatpush.xpose.msra.mxu0 0.0
        %1106 = vmatpush.xpose.msra.mxu0 0.0
        %1107 = vmatpush.xpose.msra.mxu0 0.0
        %1108 = vmatpush.xpose.msra.mxu0 0.0
        %1109 = vmatpush.xpose.msra.mxu0 0.0
        %1110 = vmatpush.xpose.msra.mxu0 0.0
        %1111 = vmatpush.xpose.msra.mxu0 %v1094
        %1112 = vmatmul.f32.gmra.mxu0 %v1091
        %v1113 = vpop.f32.mrf.mxu0
        %v1114 = vadd.f32 0.0, %v1113
        %1115 = vdwg.mxu0
        %v1117 = vsel %vm1037, %v1032, 0
        %v1120 = vsel %vm1037, %v787, 0
        %1122 = vmatpush.xpose.msra.mxu0 0.0
        %1123 = vmatpush.xpose.msra.mxu0 0.0
        %1124 = vmatpush.xpose.msra.mxu0 0.0
        %1125 = vmatpush.xpose.msra.mxu0 0.0
        %1126 = vmatpush.xpose.msra.mxu0 0.0
        %1127 = vmatpush.xpose.msra.mxu0 0.0
        %1128 = vmatpush.xpose.msra.mxu0 0.0
        %1129 = vmatpush.xpose.msra.mxu0 0.0
        %1130 = vmatpush.xpose.msra.mxu0 0.0
        %1131 = vmatpush.xpose.msra.mxu0 0.0
        %1132 = vmatpush.xpose.msra.mxu0 0.0
        %1133 = vmatpush.xpose.msra.mxu0 0.0
        %1134 = vmatpush.xpose.msra.mxu0 0.0
        %1135 = vmatpush.xpose.msra.mxu0 0.0
        %1136 = vmatpush.xpose.msra.mxu0 0.0
        %1137 = vmatpush.xpose.msra.mxu0 %v1120
        %1138 = vmatmul.f32.gmra.mxu0 %v1117
        %v1139 = vpop.f32.mrf.mxu0
        %v1140 = vadd.f32 0.0, %v1139
        %1141 = vdwg.mxu0
        %v1143 = vsel %vm1037, %v1033, 0
        %v1146 = vsel %vm1037, %v807, 0
        %1148 = vmatpush.xpose.msra.mxu0 0.0
        %1149 = vmatpush.xpose.msra.mxu0 0.0
        %1150 = vmatpush.xpose.msra.mxu0 0.0
        %1151 = vmatpush.xpose.msra.mxu0 0.0
        %1152 = vmatpush.xpose.msra.mxu0 0.0
        %1153 = vmatpush.xpose.msra.mxu0 0.0
        %1154 = vmatpush.xpose.msra.mxu0 0.0
        %1155 = vmatpush.xpose.msra.mxu0 0.0
        %1156 = vmatpush.xpose.msra.mxu0 0.0
        %1157 = vmatpush.xpose.msra.mxu0 0.0
        %1158 = vmatpush.xpose.msra.mxu0 0.0
        %1159 = vmatpush.xpose.msra.mxu0 0.0
        %1160 = vmatpush.xpose.msra.mxu0 0.0
        %1161 = vmatpush.xpose.msra.mxu0 0.0
        %1162 = vmatpush.xpose.msra.mxu0 0.0
        %1163 = vmatpush.xpose.msra.mxu0 %v1146
        %1164 = vmatmul.f32.gmra.mxu0 %v1143
        %v1165 = vpop.f32.mrf.mxu0
        %v1166 = vadd.f32 0.0, %v1165
        %1167 = vdwg.mxu0
        %v1169 = vsel %vm1037, %v1034, 0
        %v1172 = vsel %vm1037, %v827, 0
        %1174 = vmatpush.xpose.msra.mxu0 0.0
        %1175 = vmatpush.xpose.msra.mxu0 0.0
        %1176 = vmatpush.xpose.msra.mxu0 0.0
        %1177 = vmatpush.xpose.msra.mxu0 0.0
        %1178 = vmatpush.xpose.msra.mxu0 0.0
        %1179 = vmatpush.xpose.msra.mxu0 0.0
        %1180 = vmatpush.xpose.msra.mxu0 0.0
        %1181 = vmatpush.xpose.msra.mxu0 0.0
        %1182 = vmatpush.xpose.msra.mxu0 0.0
        %1183 = vmatpush.xpose.msra.mxu0 0.0
        %1184 = vmatpush.xpose.msra.mxu0 0.0
        %1185 = vmatpush.xpose.msra.mxu0 0.0
        %1186 = vmatpush.xpose.msra.mxu0 0.0
        %1187 = vmatpush.xpose.msra.mxu0 0.0
        %1188 = vmatpush.xpose.msra.mxu0 0.0
        %1189 = vmatpush.xpose.msra.mxu0 %v1172
        %1190 = vmatmul.f32.gmra.mxu0 %v1169
        %v1191 = vpop.f32.mrf.mxu0
        %v1192 = vadd.f32 0.0, %v1191
        %1193 = vdwg.mxu0
        %v1195 = vsel %vm1037, %v1035, 0
        %v1198 = vsel %vm1037, %v847, 0
        %1200 = vmatpush.xpose.msra.mxu0 0.0
        %1201 = vmatpush.xpose.msra.mxu0 0.0
        %1202 = vmatpush.xpose.msra.mxu0 0.0
        %1203 = vmatpush.xpose.msra.mxu0 0.0
        %1204 = vmatpush.xpose.msra.mxu0 0.0
        %1205 = vmatpush.xpose.msra.mxu0 0.0
        %1206 = vmatpush.xpose.msra.mxu0 0.0
        %1207 = vmatpush.xpose.msra.mxu0 0.0
        %1208 = vmatpush.xpose.msra.mxu0 0.0
        %1209 = vmatpush.xpose.msra.mxu0 0.0
        %1210 = vmatpush.xpose.msra.mxu0 0.0
        %1211 = vmatpush.xpose.msra.mxu0 0.0
        %1212 = vmatpush.xpose.msra.mxu0 0.0
        %1213 = vmatpush.xpose.msra.mxu0 0.0
        %1214 = vmatpush.xpose.msra.mxu0 0.0
        %1215 = vmatpush.xpose.msra.mxu0 %v1198
        %1216 = vmatmul.f32.gmra.mxu0 %v1195
        %v1217 = vpop.f32.mrf.mxu0
        %v1218 = vadd.f32 0.0, %v1217
        %1219 = vdwg.mxu0
        %v1221 = vsel %vm1037, %v1036, 0
        %v1224 = vsel %vm1037, %v867, 0
        %1226 = vmatpush.xpose.msra.mxu0 0.0
        %1227 = vmatpush.xpose.msra.mxu0 0.0
        %1228 = vmatpush.xpose.msra.mxu0 0.0
        %1229 = vmatpush.xpose.msra.mxu0 0.0
        %1230 = vmatpush.xpose.msra.mxu0 0.0
        %1231 = vmatpush.xpose.msra.mxu0 0.0
        %1232 = vmatpush.xpose.msra.mxu0 0.0
        %1233 = vmatpush.xpose.msra.mxu0 0.0
        %1234 = vmatpush.xpose.msra.mxu0 0.0
        %1235 = vmatpush.xpose.msra.mxu0 0.0
        %1236 = vmatpush.xpose.msra.mxu0 0.0
        %1237 = vmatpush.xpose.msra.mxu0 0.0
        %1238 = vmatpush.xpose.msra.mxu0 0.0
        %1239 = vmatpush.xpose.msra.mxu0 0.0
        %1240 = vmatpush.xpose.msra.mxu0 0.0
        %1241 = vmatpush.xpose.msra.mxu0 %v1224
        %1242 = vmatmul.f32.gmra.mxu0 %v1221
        %v1243 = vpop.f32.mrf.mxu0
        %v1244 = vadd.f32 0.0, %v1243
        %1245 = vdwg.mxu0
        %v1246 = vld [vmem:[%s317] sm:$0xff]
        %vm1247 = vcmp.gt.f32.partialorder %v1246, 0.5
        %v1248 = vsel %vm1247, 1, 0
        %vm1249 = vcmp.eq.s32.totalorder %v1248, 1
        %v1250 = vsel %vm1249, -1e+18, %v1062
        %v1251 = vsel %vm1249, -1e+18, %v1088
        %v1252 = vsel %vm1249, -1e+18, %v1114
        %v1253 = vsel %vm1249, -1e+18, %v1140
        %v1254 = vsel %vm1249, -1e+18, %v1166
        %v1255 = vsel %vm1249, -1e+18, %v1192
        %v1256 = vsel %vm1249, -1e+18, %v1218
        %v1257 = vsel %vm1249, -1e+18, %v1244
        %vm1258 = vcmask 64512
        %v1259 = vsel %vm1258, %v1250, -inf
        %1260 = vmax.xlane.f32.xlu0 %v1259
        %v1261 = vpop.xlane.xlu0 %1260
        %v1262 = vsel %vm1258, %v1251, -inf
        %1263 = vmax.xlane.f32.xlu0 %v1262
        %v1264 = vpop.xlane.xlu0 %1263
        %v1265 = vsel %vm1258, %v1252, -inf
        %1266 = vmax.xlane.f32.xlu0 %v1265
        %v1267 = vpop.xlane.xlu0 %1266
        %v1268 = vsel %vm1258, %v1253, -inf
        %1269 = vmax.xlane.f32.xlu0 %v1268
        %v1270 = vpop.xlane.xlu0 %1269
        %v1271 = vsel %vm1258, %v1254, -inf
        %1272 = vmax.xlane.f32.xlu0 %v1271
        %v1273 = vpop.xlane.xlu0 %1272
        %v1274 = vsel %vm1258, %v1255, -inf
        %1275 = vmax.xlane.f32.xlu0 %v1274
        %v1276 = vpop.xlane.xlu0 %1275
        %v1277 = vsel %vm1258, %v1256, -inf
        %1278 = vmax.xlane.f32.xlu0 %v1277
        %v1279 = vpop.xlane.xlu0 %1278
        %v1280 = vsel %vm1258, %v1257, -inf
        %1281 = vmax.xlane.f32.xlu0 %v1280
        %v1282 = vpop.xlane.xlu0 %1281
        %v1283 = vsub.f32 %v1250, %v1261
        %v1284 = vsub.f32 %v1251, %v1264
        %v1285 = vsub.f32 %v1252, %v1267
        %v1286 = vsub.f32 %v1253, %v1270
        %v1287 = vsub.f32 %v1254, %v1273
        %v1288 = vsub.f32 %v1255, %v1276
        %v1289 = vsub.f32 %v1256, %v1279
        %v1290 = vsub.f32 %v1257, %v1282
        %v1291 = vmul.f32 %v1283, 1.442695
        %v1292 = vpow.pop %v1291
        %v1293 = vmul.f32 %v1284, 1.442695
        %v1294 = vpow.pop %v1293
        %v1295 = vmul.f32 %v1285, 1.442695
        %v1296 = vpow.pop %v1295
        %v1297 = vmul.f32 %v1286, 1.442695
        %v1298 = vpow.pop %v1297
        %v1299 = vmul.f32 %v1287, 1.442695
        %v1300 = vpow.pop %v1299
        %v1301 = vmul.f32 %v1288, 1.442695
        %v1302 = vpow.pop %v1301
        %v1303 = vmul.f32 %v1289, 1.442695
        %v1304 = vpow.pop %v1303
        %v1305 = vmul.f32 %v1290, 1.442695
        %v1306 = vpow.pop %v1305
        %v1307 = vsel %vm1258, %v1292, 0.0
        %1308 = vadd.xlane.f32.xlu0 %v1307
        %v1309 = vpop.xlane.xlu0 %1308
        %v1310 = vsel %vm1258, %v1294, 0.0
        %1311 = vadd.xlane.f32.xlu0 %v1310
        %v1312 = vpop.xlane.xlu0 %1311
        %v1313 = vsel %vm1258, %v1296, 0.0
        %1314 = vadd.xlane.f32.xlu0 %v1313
        %v1315 = vpop.xlane.xlu0 %1314
        %v1316 = vsel %vm1258, %v1298, 0.0
        %1317 = vadd.xlane.f32.xlu0 %v1316
        %v1318 = vpop.xlane.xlu0 %1317
        %v1319 = vsel %vm1258, %v1300, 0.0
        %1320 = vadd.xlane.f32.xlu0 %v1319
        %v1321 = vpop.xlane.xlu0 %1320
        %v1322 = vsel %vm1258, %v1302, 0.0
        %1323 = vadd.xlane.f32.xlu0 %v1322
        %v1324 = vpop.xlane.xlu0 %1323
        %v1325 = vsel %vm1258, %v1304, 0.0
        %1326 = vadd.xlane.f32.xlu0 %v1325
        %v1327 = vpop.xlane.xlu0 %1326
        %v1328 = vsel %vm1258, %v1306, 0.0
        %1329 = vadd.xlane.f32.xlu0 %v1328
        %v1330 = vpop.xlane.xlu0 %1329
        %v1331 = vrcp.pop %v1309
        %v1332 = vrcp.pop %v1312
        %v1333 = vrcp.pop %v1315
        %v1334 = vrcp.pop %v1318
        %v1335 = vrcp.pop %v1321
        %v1336 = vrcp.pop %v1324
        %v1337 = vrcp.pop %v1327
        %v1338 = vrcp.pop %v1330
        %v1339 = vmul.f32 %v1292, %v1331
        %v1340 = vmul.f32 %v1294, %v1332
        %v1341 = vmul.f32 %v1296, %v1333
        %v1342 = vmul.f32 %v1298, %v1334
        %v1343 = vmul.f32 %v1300, %v1335
        %v1344 = vmul.f32 %v1302, %v1336
        %v1345 = vmul.f32 %v1304, %v1337
        %v1346 = vmul.f32 %v1306, %v1338
        %v1348 = vsel %vm1258, %v1339, 0
        %1350 = vmatpush.msra.mxu0 0.0
        %1351 = vmatpush.msra.mxu0 0.0
        %1352 = vmatpush.msra.mxu0 0.0
        %1353 = vmatpush.msra.mxu0 0.0
        %1354 = vmatpush.msra.mxu0 0.0
        %1355 = vmatpush.msra.mxu0 0.0
        %1356 = vmatpush.msra.mxu0 0.0
        %1357 = vmatpush.msra.mxu0 0.0
        %1358 = vmatpush.msra.mxu0 0.0
        %1359 = vmatpush.msra.mxu0 0.0
        %1360 = vmatpush.msra.mxu0 0.0
        %1361 = vmatpush.msra.mxu0 0.0
        %1362 = vmatpush.msra.mxu0 0.0
        %1363 = vmatpush.msra.mxu0 0.0
        %1364 = vmatpush.msra.mxu0 0.0
        %1365 = vmatpush.msra.mxu0 %v887
        %1366 = vmatmul.f32.gmra.mxu0 %v1348
        %v1367 = vpop.f32.mrf.mxu0
        %v1368 = vadd.f32 0.0, %v1367
        %1369 = vdwg.mxu0
        %v1371 = vsel %vm1258, %v1340, 0
        %1373 = vmatpush.msra.mxu0 0.0
        %1374 = vmatpush.msra.mxu0 0.0
        %1375 = vmatpush.msra.mxu0 0.0
        %1376 = vmatpush.msra.mxu0 0.0
        %1377 = vmatpush.msra.mxu0 0.0
        %1378 = vmatpush.msra.mxu0 0.0
        %1379 = vmatpush.msra.mxu0 0.0
        %1380 = vmatpush.msra.mxu0 0.0
        %1381 = vmatpush.msra.mxu0 0.0
        %1382 = vmatpush.msra.mxu0 0.0
        %1383 = vmatpush.msra.mxu0 0.0
        %1384 = vmatpush.msra.mxu0 0.0
        %1385 = vmatpush.msra.mxu0 0.0
        %1386 = vmatpush.msra.mxu0 0.0
        %1387 = vmatpush.msra.mxu0 0.0
        %1388 = vmatpush.msra.mxu0 %v907
        %1389 = vmatmul.f32.gmra.mxu0 %v1371
        %v1390 = vpop.f32.mrf.mxu0
        %v1391 = vadd.f32 0.0, %v1390
        %1392 = vdwg.mxu0
        %v1394 = vsel %vm1258, %v1341, 0
        %1396 = vmatpush.msra.mxu0 0.0
        %1397 = vmatpush.msra.mxu0 0.0
        %1398 = vmatpush.msra.mxu0 0.0
        %1399 = vmatpush.msra.mxu0 0.0
        %1400 = vmatpush.msra.mxu0 0.0
        %1401 = vmatpush.msra.mxu0 0.0
        %1402 = vmatpush.msra.mxu0 0.0
        %1403 = vmatpush.msra.mxu0 0.0
        %1404 = vmatpush.msra.mxu0 0.0
        %1405 = vmatpush.msra.mxu0 0.0
        %1406 = vmatpush.msra.mxu0 0.0
        %1407 = vmatpush.msra.mxu0 0.0
        %1408 = vmatpush.msra.mxu0 0.0
        %1409 = vmatpush.msra.mxu0 0.0
        %1410 = vmatpush.msra.mxu0 0.0
        %1411 = vmatpush.msra.mxu0 %v927
        %1412 = vmatmul.f32.gmra.mxu0 %v1394
        %v1413 = vpop.f32.mrf.mxu0
        %v1414 = vadd.f32 0.0, %v1413
        %1415 = vdwg.mxu0
        %v1417 = vsel %vm1258, %v1342, 0
        %1419 = vmatpush.msra.mxu0 0.0
        %1420 = vmatpush.msra.mxu0 0.0
        %1421 = vmatpush.msra.mxu0 0.0
        %1422 = vmatpush.msra.mxu0 0.0
        %1423 = vmatpush.msra.mxu0 0.0
        %1424 = vmatpush.msra.mxu0 0.0
        %1425 = vmatpush.msra.mxu0 0.0
        %1426 = vmatpush.msra.mxu0 0.0
        %1427 = vmatpush.msra.mxu0 0.0
        %1428 = vmatpush.msra.mxu0 0.0
        %1429 = vmatpush.msra.mxu0 0.0
        %1430 = vmatpush.msra.mxu0 0.0
        %1431 = vmatpush.msra.mxu0 0.0
        %1432 = vmatpush.msra.mxu0 0.0
        %1433 = vmatpush.msra.mxu0 0.0
        %1434 = vmatpush.msra.mxu0 %v947
        %1435 = vmatmul.f32.gmra.mxu0 %v1417
        %v1436 = vpop.f32.mrf.mxu0
        %v1437 = vadd.f32 0.0, %v1436
        %1438 = vdwg.mxu0
        %v1440 = vsel %vm1258, %v1343, 0
        %1442 = vmatpush.msra.mxu0 0.0
        %1443 = vmatpush.msra.mxu0 0.0
        %1444 = vmatpush.msra.mxu0 0.0
        %1445 = vmatpush.msra.mxu0 0.0
        %1446 = vmatpush.msra.mxu0 0.0
        %1447 = vmatpush.msra.mxu0 0.0
        %1448 = vmatpush.msra.mxu0 0.0
        %1449 = vmatpush.msra.mxu0 0.0
        %1450 = vmatpush.msra.mxu0 0.0
        %1451 = vmatpush.msra.mxu0 0.0
        %1452 = vmatpush.msra.mxu0 0.0
        %1453 = vmatpush.msra.mxu0 0.0
        %1454 = vmatpush.msra.mxu0 0.0
        %1455 = vmatpush.msra.mxu0 0.0
        %1456 = vmatpush.msra.mxu0 0.0
        %1457 = vmatpush.msra.mxu0 %v967
        %1458 = vmatmul.f32.gmra.mxu0 %v1440
        %v1459 = vpop.f32.mrf.mxu0
        %v1460 = vadd.f32 0.0, %v1459
        %1461 = vdwg.mxu0
        %v1463 = vsel %vm1258, %v1344, 0
        %1465 = vmatpush.msra.mxu0 0.0
        %1466 = vmatpush.msra.mxu0 0.0
        %1467 = vmatpush.msra.mxu0 0.0
        %1468 = vmatpush.msra.mxu0 0.0
        %1469 = vmatpush.msra.mxu0 0.0
        %1470 = vmatpush.msra.mxu0 0.0
        %1471 = vmatpush.msra.mxu0 0.0
        %1472 = vmatpush.msra.mxu0 0.0
        %1473 = vmatpush.msra.mxu0 0.0
        %1474 = vmatpush.msra.mxu0 0.0
        %1475 = vmatpush.msra.mxu0 0.0
        %1476 = vmatpush.msra.mxu0 0.0
        %1477 = vmatpush.msra.mxu0 0.0
        %1478 = vmatpush.msra.mxu0 0.0
        %1479 = vmatpush.msra.mxu0 0.0
        %1480 = vmatpush.msra.mxu0 %v987
        %1481 = vmatmul.f32.gmra.mxu0 %v1463
        %v1482 = vpop.f32.mrf.mxu0
        %v1483 = vadd.f32 0.0, %v1482
        %1484 = vdwg.mxu0
        %v1486 = vsel %vm1258, %v1345, 0
        %1488 = vmatpush.msra.mxu0 0.0
        %1489 = vmatpush.msra.mxu0 0.0
        %1490 = vmatpush.msra.mxu0 0.0
        %1491 = vmatpush.msra.mxu0 0.0
        %1492 = vmatpush.msra.mxu0 0.0
        %1493 = vmatpush.msra.mxu0 0.0
        %1494 = vmatpush.msra.mxu0 0.0
        %1495 = vmatpush.msra.mxu0 0.0
        %1496 = vmatpush.msra.mxu0 0.0
        %1497 = vmatpush.msra.mxu0 0.0
        %1498 = vmatpush.msra.mxu0 0.0
        %1499 = vmatpush.msra.mxu0 0.0
        %1500 = vmatpush.msra.mxu0 0.0
        %1501 = vmatpush.msra.mxu0 0.0
        %1502 = vmatpush.msra.mxu0 0.0
        %1503 = vmatpush.msra.mxu0 %v1007
        %1504 = vmatmul.f32.gmra.mxu0 %v1486
        %v1505 = vpop.f32.mrf.mxu0
        %v1506 = vadd.f32 0.0, %v1505
        %1507 = vdwg.mxu0
        %v1509 = vsel %vm1258, %v1346, 0
        %1511 = vmatpush.msra.mxu0 0.0
        %1512 = vmatpush.msra.mxu0 0.0
        %1513 = vmatpush.msra.mxu0 0.0
        %1514 = vmatpush.msra.mxu0 0.0
        %1515 = vmatpush.msra.mxu0 0.0
        %1516 = vmatpush.msra.mxu0 0.0
        %1517 = vmatpush.msra.mxu0 0.0
        %1518 = vmatpush.msra.mxu0 0.0
        %1519 = vmatpush.msra.mxu0 0.0
        %1520 = vmatpush.msra.mxu0 0.0
        %1521 = vmatpush.msra.mxu0 0.0
        %1522 = vmatpush.msra.mxu0 0.0
        %1523 = vmatpush.msra.mxu0 0.0
        %1524 = vmatpush.msra.mxu0 0.0
        %1525 = vmatpush.msra.mxu0 0.0
        %1526 = vmatpush.msra.mxu0 %v1027
        %1527 = vmatmul.f32.gmra.mxu0 %v1509
        %v1528 = vpop.f32.mrf.mxu0
        %v1529 = vadd.f32 0.0, %v1528
        %1530 = vdwg.mxu0
        %v1531 = vld [vmem:[%s5] sm:$0xf]
        %v1532 = vld [vmem:[%s5 + $0x4] sm:$0xf]
        %v1533 = vld [vmem:[%s5 + $0x8] sm:$0xf]
        %v1534 = vld [vmem:[%s5 + $0xc] sm:$0xf]
        %v1535 = vld [vmem:[%s5 + $0x10] sm:$0xf]
        %v1536 = vld [vmem:[%s5 + $0x14] sm:$0xf]
        %v1537 = vld [vmem:[%s5 + $0x18] sm:$0xf]
        %v1538 = vld [vmem:[%s5 + $0x1c] sm:$0xf]
        %v1540 = vsel %vm1037, %v1368, 0
        %vm1542 = vcmask 1043456
        %v1544 = vsel %vm1542, %v1531, 0
        %1546 = vmatpush.msra.mxu0 0.0
        %1547 = vmatpush.msra.mxu0 0.0
        %1548 = vmatpush.msra.mxu0 0.0
        %1549 = vmatpush.msra.mxu0 0.0
        %1550 = vmatpush.msra.mxu0 0.0
        %1551 = vmatpush.msra.mxu0 0.0
        %1552 = vmatpush.msra.mxu0 0.0
        %1553 = vmatpush.msra.mxu0 0.0
        %1554 = vmatpush.msra.mxu0 0.0
        %1555 = vmatpush.msra.mxu0 0.0
        %1556 = vmatpush.msra.mxu0 0.0
        %1557 = vmatpush.msra.mxu0 0.0
        %1558 = vmatpush.msra.mxu0 0.0
        %1559 = vmatpush.msra.mxu0 0.0
        %1560 = vmatpush.msra.mxu0 0.0
        %1561 = vmatpush.msra.mxu0 %v1544
        %1562 = vmatmul.f32.gmra.mxu0 %v1540
        %v1563 = vpop.f32.mrf.mxu0
        %v1564 = vadd.f32 0.0, %v1563
        %1565 = vdwg.mxu0
        %v1567 = vsel %vm1037, %v1391, 0
        %v1570 = vsel %vm1542, %v1532, 0
        %1572 = vmatpush.msra.mxu0 0.0
        %1573 = vmatpush.msra.mxu0 0.0
        %1574 = vmatpush.msra.mxu0 0.0
        %1575 = vmatpush.msra.mxu0 0.0
        %1576 = vmatpush.msra.mxu0 0.0
        %1577 = vmatpush.msra.mxu0 0.0
        %1578 = vmatpush.msra.mxu0 0.0
        %1579 = vmatpush.msra.mxu0 0.0
        %1580 = vmatpush.msra.mxu0 0.0
        %1581 = vmatpush.msra.mxu0 0.0
        %1582 = vmatpush.msra.mxu0 0.0
        %1583 = vmatpush.msra.mxu0 0.0
        %1584 = vmatpush.msra.mxu0 0.0
        %1585 = vmatpush.msra.mxu0 0.0
        %1586 = vmatpush.msra.mxu0 0.0
        %1587 = vmatpush.msra.mxu0 %v1570
        %1588 = vmatmul.f32.gmra.mxu0 %v1567
        %v1589 = vpop.f32.mrf.mxu0
        %v1590 = vadd.f32 0.0, %v1589
        %1591 = vdwg.mxu0
        %v1593 = vsel %vm1037, %v1414, 0
        %v1596 = vsel %vm1542, %v1533, 0
        %1598 = vmatpush.msra.mxu0 0.0
        %1599 = vmatpush.msra.mxu0 0.0
        %1600 = vmatpush.msra.mxu0 0.0
        %1601 = vmatpush.msra.mxu0 0.0
        %1602 = vmatpush.msra.mxu0 0.0
        %1603 = vmatpush.msra.mxu0 0.0
        %1604 = vmatpush.msra.mxu0 0.0
        %1605 = vmatpush.msra.mxu0 0.0
        %1606 = vmatpush.msra.mxu0 0.0
        %1607 = vmatpush.msra.mxu0 0.0
        %1608 = vmatpush.msra.mxu0 0.0
        %1609 = vmatpush.msra.mxu0 0.0
        %1610 = vmatpush.msra.mxu0 0.0
        %1611 = vmatpush.msra.mxu0 0.0
        %1612 = vmatpush.msra.mxu0 0.0
        %1613 = vmatpush.msra.mxu0 %v1596
        %1614 = vmatmul.f32.gmra.mxu0 %v1593
        %v1615 = vpop.f32.mrf.mxu0
        %v1616 = vadd.f32 0.0, %v1615
        %1617 = vdwg.mxu0
        %v1619 = vsel %vm1037, %v1437, 0
        %v1622 = vsel %vm1542, %v1534, 0
        %1624 = vmatpush.msra.mxu0 0.0
        %1625 = vmatpush.msra.mxu0 0.0
        %1626 = vmatpush.msra.mxu0 0.0
        %1627 = vmatpush.msra.mxu0 0.0
        %1628 = vmatpush.msra.mxu0 0.0
        %1629 = vmatpush.msra.mxu0 0.0
        %1630 = vmatpush.msra.mxu0 0.0
        %1631 = vmatpush.msra.mxu0 0.0
        %1632 = vmatpush.msra.mxu0 0.0
        %1633 = vmatpush.msra.mxu0 0.0
        %1634 = vmatpush.msra.mxu0 0.0
        %1635 = vmatpush.msra.mxu0 0.0
        %1636 = vmatpush.msra.mxu0 0.0
        %1637 = vmatpush.msra.mxu0 0.0
        %1638 = vmatpush.msra.mxu0 0.0
        %1639 = vmatpush.msra.mxu0 %v1622
        %1640 = vmatmul.f32.gmra.mxu0 %v1619
        %v1641 = vpop.f32.mrf.mxu0
        %v1642 = vadd.f32 0.0, %v1641
        %1643 = vdwg.mxu0
        %v1645 = vsel %vm1037, %v1460, 0
        %v1648 = vsel %vm1542, %v1535, 0
        %1650 = vmatpush.msra.mxu0 0.0
        %1651 = vmatpush.msra.mxu0 0.0
        %1652 = vmatpush.msra.mxu0 0.0
        %1653 = vmatpush.msra.mxu0 0.0
        %1654 = vmatpush.msra.mxu0 0.0
        %1655 = vmatpush.msra.mxu0 0.0
        %1656 = vmatpush.msra.mxu0 0.0
        %1657 = vmatpush.msra.mxu0 0.0
        %1658 = vmatpush.msra.mxu0 0.0
        %1659 = vmatpush.msra.mxu0 0.0
        %1660 = vmatpush.msra.mxu0 0.0
        %1661 = vmatpush.msra.mxu0 0.0
        %1662 = vmatpush.msra.mxu0 0.0
        %1663 = vmatpush.msra.mxu0 0.0
        %1664 = vmatpush.msra.mxu0 0.0
        %1665 = vmatpush.msra.mxu0 %v1648
        %1666 = vmatmul.f32.gmra.mxu0 %v1645
        %v1667 = vpop.f32.mrf.mxu0
        %v1668 = vadd.f32 0.0, %v1667
        %1669 = vdwg.mxu0
        %v1671 = vsel %vm1037, %v1483, 0
        %v1674 = vsel %vm1542, %v1536, 0
        %1676 = vmatpush.msra.mxu0 0.0
        %1677 = vmatpush.msra.mxu0 0.0
        %1678 = vmatpush.msra.mxu0 0.0
        %1679 = vmatpush.msra.mxu0 0.0
        %1680 = vmatpush.msra.mxu0 0.0
        %1681 = vmatpush.msra.mxu0 0.0
        %1682 = vmatpush.msra.mxu0 0.0
        %1683 = vmatpush.msra.mxu0 0.0
        %1684 = vmatpush.msra.mxu0 0.0
        %1685 = vmatpush.msra.mxu0 0.0
        %1686 = vmatpush.msra.mxu0 0.0
        %1687 = vmatpush.msra.mxu0 0.0
        %1688 = vmatpush.msra.mxu0 0.0
        %1689 = vmatpush.msra.mxu0 0.0
        %1690 = vmatpush.msra.mxu0 0.0
        %1691 = vmatpush.msra.mxu0 %v1674
        %1692 = vmatmul.f32.gmra.mxu0 %v1671
        %v1693 = vpop.f32.mrf.mxu0
        %v1694 = vadd.f32 0.0, %v1693
        %1695 = vdwg.mxu0
        %v1697 = vsel %vm1037, %v1506, 0
        %v1700 = vsel %vm1542, %v1537, 0
        %1702 = vmatpush.msra.mxu0 0.0
        %1703 = vmatpush.msra.mxu0 0.0
        %1704 = vmatpush.msra.mxu0 0.0
        %1705 = vmatpush.msra.mxu0 0.0
        %1706 = vmatpush.msra.mxu0 0.0
        %1707 = vmatpush.msra.mxu0 0.0
        %1708 = vmatpush.msra.mxu0 0.0
        %1709 = vmatpush.msra.mxu0 0.0
        %1710 = vmatpush.msra.mxu0 0.0
        %1711 = vmatpush.msra.mxu0 0.0
        %1712 = vmatpush.msra.mxu0 0.0
        %1713 = vmatpush.msra.mxu0 0.0
        %1714 = vmatpush.msra.mxu0 0.0
        %1715 = vmatpush.msra.mxu0 0.0
        %1716 = vmatpush.msra.mxu0 0.0
        %1717 = vmatpush.msra.mxu0 %v1700
        %1718 = vmatmul.f32.gmra.mxu0 %v1697
        %v1719 = vpop.f32.mrf.mxu0
        %v1720 = vadd.f32 0.0, %v1719
        %1721 = vdwg.mxu0
        %v1723 = vsel %vm1037, %v1529, 0
        %v1726 = vsel %vm1542, %v1538, 0
        %1728 = vmatpush.msra.mxu0 0.0
        %1729 = vmatpush.msra.mxu0 0.0
        %1730 = vmatpush.msra.mxu0 0.0
        %1731 = vmatpush.msra.mxu0 0.0
        %1732 = vmatpush.msra.mxu0 0.0
        %1733 = vmatpush.msra.mxu0 0.0
        %1734 = vmatpush.msra.mxu0 0.0
        %1735 = vmatpush.msra.mxu0 0.0
        %1736 = vmatpush.msra.mxu0 0.0
        %1737 = vmatpush.msra.mxu0 0.0
        %1738 = vmatpush.msra.mxu0 0.0
        %1739 = vmatpush.msra.mxu0 0.0
        %1740 = vmatpush.msra.mxu0 0.0
        %1741 = vmatpush.msra.mxu0 0.0
        %1742 = vmatpush.msra.mxu0 0.0
        %1743 = vmatpush.msra.mxu0 %v1726
        %1744 = vmatmul.f32.gmra.mxu0 %v1723
        %v1745 = vpop.f32.mrf.mxu0
        %v1746 = vadd.f32 0.0, %v1745
        %1747 = vdwg.mxu0
        %v1748 = vsel %vm320, %v1564, 0.0
        %v1749 = vsel %vm320, %v1590, 0.0
        %v1750 = vadd.f32 %v1748, %v1749
        %v1751 = vsel %vm320, %v1616, 0.0
        %v1752 = vadd.f32 %v1750, %v1751
        %v1753 = vsel %vm320, %v1642, 0.0
        %v1754 = vadd.f32 %v1752, %v1753
        %v1755 = vsel %vm320, %v1668, 0.0
        %v1756 = vadd.f32 %v1754, %v1755
        %v1757 = vsel %vm320, %v1694, 0.0
        %v1758 = vadd.f32 %v1756, %v1757
        %v1759 = vsel %vm320, %v1720, 0.0
        %v1760 = vadd.f32 %v1758, %v1759
        %v1761 = vsel %vm320, %v1746, 0.0
        %v1762 = vadd.f32 %v1760, %v1761
        %v1763 = vperm.slane %v319, 4
        %v1764 = vadd.f32 %v1762, %v1763
        %v1765 = vadd.f32 %v1764, %v318
        %v1766 = vsel %vm320, %v1765, 0.0
        %1767 = vadd.xlane.f32.xlu0 %v1766
        %v1768 = vpop.xlane.xlu0 %1767
        %v1769 = vmul.f32 %v1768, %v330
        %v1770 = vsub.f32 %v1765, %v1769
        %v1771 = vmul.f32 %v1770, %v1770
        %v1772 = vsel %vm320, %v1771, 0.0
        %1773 = vadd.xlane.f32.xlu0 %v1772
        %v1774 = vpop.xlane.xlu0 %1773
        %v1775 = vmul.f32 %v1774, %v330
        %v1776 = vadd.f32 %v1775, 1e-06
        %v1777 = vrsqrt.pop %v1776
        %v1778 = vmul.f32 %v1777, %v1776
        %v1779 = vmul.f32 %v1778, %v1777
        %v1780 = vmul.f32 0.5, %v1779
        %v1781 = vsub.f32 1.5, %v1780
        %v1782 = vmul.f32 %v1777, %v1781
        %vm1783 = vweird.f32 %v1776
        %vm1784 = vweird.f32 %v1777
        %vm1785 = vmor %vm1783, %vm1784
        %v1786 = vsel %vm1785, %v1777, %v1782
        %v1787 = vmul.f32 %v1770, %v1786
        %v1788 = vperm.slane %v319, 2
        %v1789 = vmul.f32 %v1787, %v1788
        %v1790 = vperm.slane %v319, 3
        %v1791 = vadd.f32 %v1789, %v1790
        %v1792 = vld [vmem:[%s6] sm:$0xff]
        %v1793 = vld [vmem:[%s6 + $0x8] sm:$0xff]
        %v1794 = vld [vmem:[%s6 + $0x10] sm:$0xff]
        %v1795 = vld [vmem:[%s6 + $0x18] sm:$0xff]
        %v1796 = vperm.slane %v319, 6
        %v1798 = vsel %vm320, %v1791, 0
        %1800 = vmatpush.msra.mxu0 0.0
        %1801 = vmatpush.msra.mxu0 0.0
        %1802 = vmatpush.msra.mxu0 0.0
        %1803 = vmatpush.msra.mxu0 0.0
        %1804 = vmatpush.msra.mxu0 0.0
        %1805 = vmatpush.msra.mxu0 0.0
        %1806 = vmatpush.msra.mxu0 0.0
        %1807 = vmatpush.msra.mxu0 0.0
        %1808 = vmatpush.msra.mxu0 0.0
        %1809 = vmatpush.msra.mxu0 0.0
        %1810 = vmatpush.msra.mxu0 0.0
        %1811 = vmatpush.msra.mxu0 0.0
        %1812 = vmatpush.msra.mxu0 %v1795
        %1813 = vmatpush.msra.mxu0 %v1794
        %1814 = vmatpush.msra.mxu0 %v1793
        %1815 = vmatpush.msra.mxu0 %v1792
        %1816 = vmatmul.f32.gmra.mxu0 %v1798
        %v1817 = vpop.f32.mrf.mxu0
        %v1818 = vadd.f32 %v1796, %v1817
        %1819 = vdwg.mxu0
        %v1820 = vmax.f32 %v1818, 0.0
        %v1821 = vld [vmem:[%s7] sm:$0xff]
        %v1822 = vld [vmem:[%s7 + $0x8] sm:$0xff]
        %v1823 = vld [vmem:[%s7 + $0x10] sm:$0xff]
        %v1824 = vld [vmem:[%s7 + $0x18] sm:$0xff]
        %v1825 = vld [vmem:[%s7 + $0x20] sm:$0xff]
        %v1826 = vld [vmem:[%s7 + $0x28] sm:$0xff]
        %v1827 = vld [vmem:[%s7 + $0x30] sm:$0xff]
        %v1828 = vld [vmem:[%s7 + $0x38] sm:$0xff]
        %v1829 = vperm.slane %v319, 5
        %vm1830 = vcmask 523264
        %v1832 = vsel %vm1830, %v1820, 0
        %1834 = vmatpush.msra.mxu0 0.0
        %1835 = vmatpush.msra.mxu0 0.0
        %1836 = vmatpush.msra.mxu0 0.0
        %1837 = vmatpush.msra.mxu0 0.0
        %1838 = vmatpush.msra.mxu0 0.0
        %1839 = vmatpush.msra.mxu0 0.0
        %1840 = vmatpush.msra.mxu0 0.0
        %1841 = vmatpush.msra.mxu0 0.0
        %1842 = vmatpush.msra.mxu0 %v1828
        %1843 = vmatpush.msra.mxu0 %v1827
        %1844 = vmatpush.msra.mxu0 %v1826
        %1845 = vmatpush.msra.mxu0 %v1825
        %1846 = vmatpush.msra.mxu0 %v1824
        %1847 = vmatpush.msra.mxu0 %v1823
        %1848 = vmatpush.msra.mxu0 %v1822
        %1849 = vmatpush.msra.mxu0 %v1821
        %1850 = vmatmul.f32.gmra.mxu0 %v1832
        %v1851 = vpop.f32.mrf.mxu0
        %v1852 = vadd.f32 %v1829, %v1851
        %1853 = vdwg.mxu0
        %v1854 = vadd.f32 %v1852, %v1765
        %1855 = vst.msk [vmem:[%s309] sm:$0xff] %vm320, %v1854
        %s1856 = sand.u32 %s208, 1
        %s1857 = scalar_lea.sflag [#allocation3], %s1856
        %s1858 = sand.u32 %s208, 1
        %s1859 = smul.addr %s1858, 8
        %s1860 = scalar_lea.vmem [#allocation2], %s1859
        // Predicated region
        $region53: #{tpu_custom_call.1} parent=51 // pred_check
          %p1861 = pneg %p218
        $region54: #{tpu_custom_call.1} parent=51 // pred_check_branch
          %1863 = sbr.rel (%p1861) target = $region56
        $region55: #{tpu_custom_call.1} parent=51 // pred_region
          %1865 = vsyncadd %s1857, 0
          %s1866 = smul.addr %s22, 8
          %s1867 = scalar_lea.hbm %s8, %s1866
          %s1869 = sshll.u32 %s1860, 4
          %s1870 = int_to_ptr.vmem [resolvable:$true] %s1869
          %s1871 = sshll.u32 %s1867, 4
          %s1872 = int_to_ptr.hbm [resolvable:$true] %s1871
          %1874 = dma.vmem_to_hbm [thread:$0]  %s1870, 128, %s1872, %s1857
        $region56: #{tpu_custom_call.1} parent=51 // pred_fallthru
          _
      $region52: #{tpu_custom_call.1} parent=5 // pred_fallthru
        _
      %p1875 = scmp.le.s32.totalorder 2, %s17
      // Predicated region
      $region57: #{tpu_custom_call.1} parent=5 // pred_check
        %p1876 = pneg %p1875
      $region58: #{tpu_custom_call.1} parent=5 // pred_check_branch
        %1878 = sbr.rel (%p1876) target = $region60
      $region59: #{tpu_custom_call.1} parent=5 // pred_region
        %s1879 = ssub.s32 %s17, 2
        // Predicated region
        $region61: #{tpu_custom_call.1} parent=59 // pred_check
          %p1880 = pneg %p224
        $region62: #{tpu_custom_call.1} parent=59 // pred_check_branch
          %1882 = sbr.rel (%p1880) target = $region64
        $region63: #{tpu_custom_call.1} parent=59 // pred_region
          %s1883 = sand.u32 %s209, 1
          %s1884 = scalar_lea.sflag [#allocation3], %s1883
          %s1885 = sand.u32 %s209, 1
          %s1886 = smul.addr %s1885, 8
          %s1887 = scalar_lea.vmem [#allocation2], %s1886
          %1889 = dma.done %s1884, 128
        $region64: #{tpu_custom_call.1} parent=59 // pred_fallthru
          _
      $region60: #{tpu_custom_call.1} parent=5 // pred_fallthru
        _
    $region6: #{tpu_custom_call.1} parent=1 // loop_footer
      %s21 = sadd.s32 1, %s17
    $region7: #{tpu_custom_call.1} parent=1 // loop_footer_branch
      %16 = sbr.rel target = $region3
    $region8: #{tpu_custom_call.1} parent=1 // loop_exit
      _
    %1890 = vsyncpa [#allocation3], 1
    %s1891 = scalar_lea.sflag [#allocation3], 1
    %1892 = vsyncpa %s1891, 1

</llo_original>
